<compile_context>
chip_gen: v7x
topology: tpu7x:2x2x1
jax: 0.10.0
libtpu: 0.0.40
codegen_flags: <defaults>
</compile_context>

<pallas_src>
import jax
import jax.numpy as jnp
from jax import lax
from jax.experimental import pallas as pl
from jax.experimental.pallas import tpu as pltpu

EPS = 1e-5


# --------------------------------------------------------------------------
# Kernel
# --------------------------------------------------------------------------
def _bn_relu(acc, t, tt, g, be, inv_count):
    """Training-mode BatchNorm + ReLU on a lane-dense (M, W*C) f32 slab.

    t:  (C, W*C) 0/1 matrix with t[c, w*C + c] = 1  (channel -> lane broadcast)
    tt: (W*C, C) its transpose                      (lane -> channel reduction)
    g, be: (1, C) BN gamma / beta.
    inv_count: Python float, 1 / (N*H*W).
    """
    # Per-lane partial sums (XLU cross-sublane reduce; MXU stays free).
    s = jnp.sum(acc, axis=0, keepdims=True)                           # (1, W*C)
    ss = jnp.sum(acc * acc, axis=0, keepdims=True)                    # (1, W*C)
    # Lane -> channel reduction (tiny MXU matmuls, exact 0/1 weights).
    s_c = jnp.dot(s, tt, preferred_element_type=jnp.float32)          # (1, C)
    ss_c = jnp.dot(ss, tt, preferred_element_type=jnp.float32)        # (1, C)
    mean = s_c * inv_count
    var = ss_c * inv_count - mean * mean                              # biased var
    scale_c = g * lax.rsqrt(var + EPS)
    shift_c = be - mean * scale_c
    # Channel -> lane broadcast (tiny MXU matmuls), then one fused FMA + ReLU.
    scale_l = jnp.dot(scale_c, t, preferred_element_type=jnp.float32)  # (1, W*C)
    shift_l = jnp.dot(shift_c, t, preferred_element_type=jnp.float32)  # (1, W*C)
    return jnp.maximum(acc * scale_l + shift_l, 0.0)


def conv_block_kernel(xpad_ref, w1_ref, t1_ref, t1t_ref, g1_ref, be1_ref,
                      w2_ref, t2_ref, t2t_ref, g2_ref, be2_ref,
                      out_ref, pad2_ref):
    N, Hp, WCin = xpad_ref.shape
    H = Hp - 2
    M = N * H
    WC1 = w1_ref.shape[2]
    WC2 = w2_ref.shape[2]
    C1 = t1_ref.shape[0]
    C2 = t2_ref.shape[0]
    inv1 = 1.0 / float(M * (WC1 // C1))      # 1 / (N*H*W)
    inv2 = 1.0 / float(M * (WC2 // C2))

    # ---- conv1: 3 banded bf16 matmuls (one per vertical tap), f32 accumulate ----
    acc = jnp.dot(xpad_ref[:, 0:H, :].reshape(M, WCin), w1_ref[0],
                  preferred_element_type=jnp.float32)
    for kh in (1, 2):
        lhs = xpad_ref[:, kh:kh + H, :].reshape(M, WCin)              # bf16
        acc = acc + jnp.dot(lhs, w1_ref[kh],
                            preferred_element_type=jnp.float32)

    # (conv bias dropped: cancelled exactly by training-mode BN mean subtraction)
    y = _bn_relu(acc, t1_ref[...], t1t_ref[...], g1_ref[...], be1_ref[...], inv1)

    # ---- stage conv2 input (bf16); zero only the 1-row vertical halo ----
    pad2_ref[:, 0:1, :] = jnp.zeros((N, 1, WC1), pad2_ref.dtype)
    pad2_ref[:, H + 1:H + 2, :] = jnp.zeros((N, 1, WC1), pad2_ref.dtype)
    pad2_ref[:, 1:H + 1, :] = y.reshape(N, H, WC1).astype(pad2_ref.dtype)

    # ---- conv2: 3 banded bf16 matmuls ----
    acc2 = jnp.dot(pad2_ref[:, 0:H, :].reshape(M, WC1), w2_ref[0],
                   preferred_element_type=jnp.float32)
    for kh in (1, 2):
        lhs = pad2_ref[:, kh:kh + H, :].reshape(M, WC1)               # bf16
        acc2 = acc2 + jnp.dot(lhs, w2_ref[kh],
                              preferred_element_type=jnp.float32)

    z = _bn_relu(acc2, t2_ref[...], t2t_ref[...], g2_ref[...], be2_ref[...], inv2)
    out_ref[...] = z.astype(out_ref.dtype)                            # (N*H, W*C2)


# --------------------------------------------------------------------------
# Wrapper / weight re-layout
# --------------------------------------------------------------------------
def _band_weights(w_oihw, W):
    """Torch conv weight (Cout, Cin, 3, 3) -> banded matrices (3, W*Cin, W*Cout).

    band[kh, iw*Cin+ci, ow*Cout+co] = w[co, ci, kh, iw-ow+1] for 0 <= iw-ow+1 < 3,
    else 0.  Horizontal taps and width zero-padding are folded into the weight so
    each conv is 3 matmuls whose outputs are already lane-dense (.., W*Cout).
    """
    Cout, Cin = w_oihw.shape[0], w_oihw.shape[1]
    wk = jnp.transpose(w_oihw, (2, 3, 1, 0))                 # (kh, kw, Cin, Cout)
    iw = jnp.arange(W)[:, None]
    ow = jnp.arange(W)[None, :]
    kw = iw - ow + 1                                          # (W, W)
    valid = ((kw >= 0) & (kw <= 2)).astype(w_oihw.dtype)[..., None, None]
    kw_c = jnp.clip(kw, 0, 2)
    bands = []
    for kh in range(3):
        blocks = wk[kh][kw_c] * valid                         # (W, W, Cin, Cout)
        bands.append(
            jnp.transpose(blocks, (0, 2, 1, 3)).reshape(W * Cin, W * Cout))
    return jnp.stack(bands)


def _chan_tile(C, W):
    """0/1 matrix T of shape (C, W*C) with T[c, w*C + c] = 1."""
    lane = jnp.arange(W * C)
    chan = jnp.arange(C)
    return (lane[None, :] % C == chan[:, None]).astype(jnp.float32)


def conv_block_forward(x_nchw, params):
    """x_nchw: (N, Cin, H, W) float32. Returns (N, Cout, H, W)."""
    w1, b1, g1, be1, w2, b2, g2, be2 = params
    del b1, b2   # per-channel conv biases are a no-op under training-mode BN
    N, Cin, H, W = x_nchw.shape
    C1, C2 = w1.shape[0], w2.shape[0]

    # NCHW -> lane-dense (N, H, W*Cin), pad H by 1, bf16 MXU operand.
    x = jnp.transpose(x_nchw, (0, 2, 3, 1)).reshape(N, H, W * Cin)
    xpad = jnp.pad(x, ((0, 0), (1, 1), (0, 0))).astype(jnp.bfloat16)

    w1b = _band_weights(w1, W).astype(jnp.bfloat16)     # (3, W*Cin, W*C1)
    w2b = _band_weights(w2, W).astype(jnp.bfloat16)     # (3, W*C1,  W*C2)
    t1 = _chan_tile(C1, W)                              # (C1, W*C1) f32
    t2 = _chan_tile(C2, W)                              # (C2, W*C2) f32

    vmem = pl.BlockSpec(memory_space=pltpu.MemorySpace.VMEM)
    out_flat = pl.pallas_call(
        conv_block_kernel,
        out_shape=jax.ShapeDtypeStruct((N * H, W * C2), jnp.float32),
        in_specs=[vmem] * 11,
        out_specs=vmem,
        scratch_shapes=[pltpu.VMEM((N, H + 2, W * C1), jnp.bfloat16)],
    )(xpad, w1b, t1, t1.T, g1.reshape(1, C1), be1.reshape(1, C1),
      w2b, t2, t2.T, g2.reshape(1, C2), be2.reshape(1, C2))

    # (N*H, W*C2) -> (N, H, W, C2) -> NCHW
    return jnp.transpose(out_flat.reshape(N, H, W, C2), (0, 3, 1, 2))


# --------------------------------------------------------------------------
# Pure-JAX reference (matches the PyTorch module, biases included) + test
# --------------------------------------------------------------------------
def conv_block_ref(x_nchw, params):
    w1, b1, g1, be1, w2, b2, g2, be2 = params

    def conv(x, w, b):
        y = lax.conv_general_dilated(
            x, w, window_strides=(1, 1), padding=((1, 1), (1, 1)),
            dimension_numbers=('NCHW', 'OIHW', 'NCHW'))
        return y + b[None, :, None, None]

    def bn_relu(y, g, be):
        mean = jnp.mean(y, axis=(0, 2, 3), keepdims=True)
        var = jnp.mean((y - mean) ** 2, axis=(0, 2, 3), keepdims=True)
        y = (y - mean) * lax.rsqrt(var + EPS) * g[None, :, None, None] \
            + be[None, :, None, None]
        return jnp.maximum(y, 0.0)

    y = bn_relu(conv(x_nchw, w1, b1), g1, be1)
    z = bn_relu(conv(y, w2, b2), g2, be2)
    return z


def make_params(key, in_c, out_c):
    ks = jax.random.split(key, 8)
    w1 = 0.1 * jax.random.normal(ks[0], (out_c, in_c, 3, 3), jnp.float32)
    b1 = 0.1 * jax.random.normal(ks[1], (out_c,), jnp.float32)
    g1 = 1.0 + 0.1 * jax.random.normal(ks[2], (out_c,), jnp.float32)
    be1 = 0.1 * jax.random.normal(ks[3], (out_c,), jnp.float32)
    w2 = 0.1 * jax.random.normal(ks[4], (out_c, out_c, 3, 3), jnp.float32)
    b2 = 0.1 * jax.random.normal(ks[5], (out_c,), jnp.float32)
    g2 = 1.0 + 0.1 * jax.random.normal(ks[6], (out_c,), jnp.float32)
    be2 = 0.1 * jax.random.normal(ks[7], (out_c,), jnp.float32)
    return (w1, b1, g1, be1, w2, b2, g2, be2)


if __name__ == "__main__":
    key = jax.random.PRNGKey(0)
    k_x, k_p = jax.random.split(key)

    N, IN_C, OUT_C, H, W = 2, 4, 8, 16, 16
    x = jax.random.normal(k_x, (N, IN_C, H, W), jnp.float32)
    params = make_params(k_p, IN_C, OUT_C)

    out = jax.jit(conv_block_forward)(x, params)
    out = jax.block_until_ready(out)

    ref = conv_block_ref(x, params)
    assert out.shape == (N, OUT_C, H, W), out.shape
    err = float(jnp.max(jnp.abs(out - ref)))
    # bf16 MXU operands (f32 accumulation) -> slightly looser tolerance than f32.
    assert jnp.allclose(out, ref, atol=5e-2, rtol=5e-2), f"max abs err = {err}"

    print("KERNEL_OK")
</pallas_src>

<mosaic_0001>
module attributes {stable_mosaic.version = 11 : i64} {
  func.func @conv_block_kernel(%arg0: memref<2x18x64xbf16, #tpu.memory_space<vmem>>, %arg1: memref<3x64x128xbf16, #tpu.memory_space<vmem>>, %arg2: memref<8x128xf32, #tpu.memory_space<vmem>>, %arg3: memref<128x8xf32, #tpu.memory_space<vmem>>, %arg4: memref<1x8xf32, #tpu.memory_space<vmem>>, %arg5: memref<1x8xf32, #tpu.memory_space<vmem>>, %arg6: memref<3x128x128xbf16, #tpu.memory_space<vmem>>, %arg7: memref<8x128xf32, #tpu.memory_space<vmem>>, %arg8: memref<128x8xf32, #tpu.memory_space<vmem>>, %arg9: memref<1x8xf32, #tpu.memory_space<vmem>>, %arg10: memref<1x8xf32, #tpu.memory_space<vmem>>, %arg11: memref<32x128xf32, #tpu.memory_space<vmem>>, %arg12: memref<2x18x128xbf16, #tpu.memory_space<vmem>>) attributes {dimension_semantics = [], scalar_prefetch = 0 : i64, scratch_operands = 1 : i64, tpu.core_type = #tpu.core_type<tc>} {
    %c0 = arith.constant 0 : index
    %c0_0 = arith.constant 0 : index
    %c0_1 = arith.constant 0 : index
    %0 = vector.load %arg0[%c0, %c0_0, %c0_1] : memref<2x18x64xbf16, #tpu.memory_space<vmem>>, vector<2x16x64xbf16>
    %1 = vector.shape_cast %0 : vector<2x16x64xbf16> to vector<32x64xbf16>
    %c0_2 = arith.constant 0 : index
    %c0_3 = arith.constant 0 : index
    %c0_4 = arith.constant 0 : index
    %2 = vector.load %arg1[%c0_2, %c0_3, %c0_4] : memref<3x64x128xbf16, #tpu.memory_space<vmem>>, vector<1x64x128xbf16>
    %3 = vector.shape_cast %2 : vector<1x64x128xbf16> to vector<64x128xbf16>
    %cst = arith.constant dense<0.000000e+00> : vector<32x128xf32>
    %4 = tpu.matmul %1, %3, %cst {dimension_numbers = #tpu.dot_dimension_numbers<[1], [0], [0], [1], [0, 0, 1, 1], [], []>} : vector<32x64xbf16>, vector<64x128xbf16>, vector<32x128xf32> -> vector<32x128xf32>
    %c0_5 = arith.constant 0 : index
    %c1 = arith.constant 1 : index
    %c0_6 = arith.constant 0 : index
    %5 = vector.load %arg0[%c0_5, %c1, %c0_6] : memref<2x18x64xbf16, #tpu.memory_space<vmem>>, vector<2x16x64xbf16>
    %6 = vector.shape_cast %5 : vector<2x16x64xbf16> to vector<32x64xbf16>
    %c1_7 = arith.constant 1 : index
    %c0_8 = arith.constant 0 : index
    %c0_9 = arith.constant 0 : index
    %7 = vector.load %arg1[%c1_7, %c0_8, %c0_9] : memref<3x64x128xbf16, #tpu.memory_space<vmem>>, vector<1x64x128xbf16>
    %8 = vector.shape_cast %7 : vector<1x64x128xbf16> to vector<64x128xbf16>
    %cst_10 = arith.constant dense<0.000000e+00> : vector<32x128xf32>
    %9 = tpu.matmul %6, %8, %cst_10 {dimension_numbers = #tpu.dot_dimension_numbers<[1], [0], [0], [1], [0, 0, 1, 1], [], []>} : vector<32x64xbf16>, vector<64x128xbf16>, vector<32x128xf32> -> vector<32x128xf32>
    %10 = arith.addf %4, %9 : vector<32x128xf32>
    %c0_11 = arith.constant 0 : index
    %c2 = arith.constant 2 : index
    %c0_12 = arith.constant 0 : index
    %11 = vector.load %arg0[%c0_11, %c2, %c0_12] : memref<2x18x64xbf16, #tpu.memory_space<vmem>>, vector<2x16x64xbf16>
    %12 = vector.shape_cast %11 : vector<2x16x64xbf16> to vector<32x64xbf16>
    %c2_13 = arith.constant 2 : index
    %c0_14 = arith.constant 0 : index
    %c0_15 = arith.constant 0 : index
    %13 = vector.load %arg1[%c2_13, %c0_14, %c0_15] : memref<3x64x128xbf16, #tpu.memory_space<vmem>>, vector<1x64x128xbf16>
    %14 = vector.shape_cast %13 : vector<1x64x128xbf16> to vector<64x128xbf16>
    %cst_16 = arith.constant dense<0.000000e+00> : vector<32x128xf32>
    %15 = tpu.matmul %12, %14, %cst_16 {dimension_numbers = #tpu.dot_dimension_numbers<[1], [0], [0], [1], [0, 0, 1, 1], [], []>} : vector<32x64xbf16>, vector<64x128xbf16>, vector<32x128xf32> -> vector<32x128xf32>
    %16 = arith.addf %10, %15 : vector<32x128xf32>
    %c0_17 = arith.constant 0 : index
    %c0_18 = arith.constant 0 : index
    %17 = vector.load %arg2[%c0_17, %c0_18] : memref<8x128xf32, #tpu.memory_space<vmem>>, vector<8x128xf32>
    %c0_19 = arith.constant 0 : index
    %c0_20 = arith.constant 0 : index
    %18 = vector.load %arg3[%c0_19, %c0_20] : memref<128x8xf32, #tpu.memory_space<vmem>>, vector<128x8xf32>
    %c0_21 = arith.constant 0 : index
    %c0_22 = arith.constant 0 : index
    %19 = vector.load %arg4[%c0_21, %c0_22] : memref<1x8xf32, #tpu.memory_space<vmem>>, vector<1x8xf32>
    %c0_23 = arith.constant 0 : index
    %c0_24 = arith.constant 0 : index
    %20 = vector.load %arg5[%c0_23, %c0_24] : memref<1x8xf32, #tpu.memory_space<vmem>>, vector<1x8xf32>
    %cst_25 = arith.constant dense<0.000000e+00> : vector<128xf32>
    %21 = vector.multi_reduction <add>, %16, %cst_25 [0] : vector<32x128xf32> to vector<128xf32>
    %22 = vector.shape_cast %21 : vector<128xf32> to vector<1x128xf32>
    %23 = arith.mulf %16, %16 : vector<32x128xf32>
    %cst_26 = arith.constant dense<0.000000e+00> : vector<128xf32>
    %24 = vector.multi_reduction <add>, %23, %cst_26 [0] : vector<32x128xf32> to vector<128xf32>
    %25 = vector.shape_cast %24 : vector<128xf32> to vector<1x128xf32>
    %cst_27 = arith.constant dense<0.000000e+00> : vector<1x8xf32>
    %26 = tpu.matmul %22, %18, %cst_27 {dimension_numbers = #tpu.dot_dimension_numbers<[1], [0], [0], [1], [0, 0, 1, 1], [], []>} : vector<1x128xf32>, vector<128x8xf32>, vector<1x8xf32> -> vector<1x8xf32>
    %cst_28 = arith.constant dense<0.000000e+00> : vector<1x8xf32>
    %27 = tpu.matmul %25, %18, %cst_28 {dimension_numbers = #tpu.dot_dimension_numbers<[1], [0], [0], [1], [0, 0, 1, 1], [], []>} : vector<1x128xf32>, vector<128x8xf32>, vector<1x8xf32> -> vector<1x8xf32>
    %cst_29 = arith.constant 0.001953125 : f32
    %28 = vector.broadcast %cst_29 : f32 to vector<1x8xf32>
    %29 = arith.mulf %26, %28 : vector<1x8xf32>
    %cst_30 = arith.constant 0.001953125 : f32
    %30 = vector.broadcast %cst_30 : f32 to vector<1x8xf32>
    %31 = arith.mulf %27, %30 : vector<1x8xf32>
    %32 = arith.mulf %29, %29 : vector<1x8xf32>
    %33 = arith.subf %31, %32 : vector<1x8xf32>
    %cst_31 = arith.constant 9.99999974E-6 : f32
    %34 = vector.broadcast %cst_31 : f32 to vector<1x8xf32>
    %35 = arith.addf %33, %34 : vector<1x8xf32>
    %36 = math.rsqrt %35 : vector<1x8xf32>
    %37 = arith.mulf %19, %36 : vector<1x8xf32>
    %38 = arith.mulf %29, %37 : vector<1x8xf32>
    %39 = arith.subf %20, %38 : vector<1x8xf32>
    %cst_32 = arith.constant dense<0.000000e+00> : vector<1x128xf32>
    %40 = tpu.matmul %37, %17, %cst_32 {dimension_numbers = #tpu.dot_dimension_numbers<[1], [0], [0], [1], [0, 0, 1, 1], [], []>} : vector<1x8xf32>, vector<8x128xf32>, vector<1x128xf32> -> vector<1x128xf32>
    %cst_33 = arith.constant dense<0.000000e+00> : vector<1x128xf32>
    %41 = tpu.matmul %39, %17, %cst_33 {dimension_numbers = #tpu.dot_dimension_numbers<[1], [0], [0], [1], [0, 0, 1, 1], [], []>} : vector<1x8xf32>, vector<8x128xf32>, vector<1x128xf32> -> vector<1x128xf32>
    %42 = vector.broadcast %40 : vector<1x128xf32> to vector<32x128xf32>
    %43 = arith.mulf %16, %42 : vector<32x128xf32>
    %44 = vector.broadcast %41 : vector<1x128xf32> to vector<32x128xf32>
    %45 = arith.addf %43, %44 : vector<32x128xf32>
    %cst_34 = arith.constant 0.000000e+00 : f32
    %46 = vector.broadcast %cst_34 : f32 to vector<32x128xf32>
    %47 = arith.maximumf %45, %46 : vector<32x128xf32>
    %cst_35 = arith.constant 0.000000e+00 : bf16
    %48 = vector.broadcast %cst_35 : bf16 to vector<2x1x128xbf16>
    %c0_36 = arith.constant 0 : index
    %c0_37 = arith.constant 0 : index
    %c0_38 = arith.constant 0 : index
    %49 = vector.load %arg12[%c0_36, %c0_37, %c0_38] : memref<2x18x128xbf16, #tpu.memory_space<vmem>>, vector<2x1x128xbf16>
    tpu.vector_store %arg12[%c0_36, %c0_37, %c0_38], %48 {strides = array<i32>} : memref<2x18x128xbf16, #tpu.memory_space<vmem>>, vector<2x1x128xbf16>,
    %cst_39 = arith.constant 0.000000e+00 : bf16
    %50 = vector.broadcast %cst_39 : bf16 to vector<2x1x128xbf16>
    %c0_40 = arith.constant 0 : index
    %c17 = arith.constant 17 : index
    %c0_41 = arith.constant 0 : index
    %51 = vector.load %arg12[%c0_40, %c17, %c0_41] : memref<2x18x128xbf16, #tpu.memory_space<vmem>>, vector<2x1x128xbf16>
    tpu.vector_store %arg12[%c0_40, %c17, %c0_41], %50 {strides = array<i32>} : memref<2x18x128xbf16, #tpu.memory_space<vmem>>, vector<2x1x128xbf16>,
    %52 = vector.shape_cast %47 : vector<32x128xf32> to vector<2x16x128xf32>
    %53 = arith.truncf %52 : vector<2x16x128xf32> to vector<2x16x128xbf16>
    %c0_42 = arith.constant 0 : index
    %c1_43 = arith.constant 1 : index
    %c0_44 = arith.constant 0 : index
    %54 = vector.load %arg12[%c0_42, %c1_43, %c0_44] : memref<2x18x128xbf16, #tpu.memory_space<vmem>>, vector<2x16x128xbf16>
    tpu.vector_store %arg12[%c0_42, %c1_43, %c0_44], %53 {strides = array<i32>} : memref<2x18x128xbf16, #tpu.memory_space<vmem>>, vector<2x16x128xbf16>,
    %c0_45 = arith.constant 0 : index
    %c0_46 = arith.constant 0 : index
    %c0_47 = arith.constant 0 : index
    %55 = vector.load %arg12[%c0_45, %c0_46, %c0_47] : memref<2x18x128xbf16, #tpu.memory_space<vmem>>, vector<2x16x128xbf16>
    %56 = vector.shape_cast %55 : vector<2x16x128xbf16> to vector<32x128xbf16>
    %c0_48 = arith.constant 0 : index
    %c0_49 = arith.constant 0 : index
    %c0_50 = arith.constant 0 : index
    %57 = vector.load %arg6[%c0_48, %c0_49, %c0_50] : memref<3x128x128xbf16, #tpu.memory_space<vmem>>, vector<1x128x128xbf16>
    %58 = vector.shape_cast %57 : vector<1x128x128xbf16> to vector<128x128xbf16>
    %cst_51 = arith.constant dense<0.000000e+00> : vector<32x128xf32>
    %59 = tpu.matmul %56, %58, %cst_51 {dimension_numbers = #tpu.dot_dimension_numbers<[1], [0], [0], [1], [0, 0, 1, 1], [], []>} : vector<32x128xbf16>, vector<128x128xbf16>, vector<32x128xf32> -> vector<32x128xf32>
    %c0_52 = arith.constant 0 : index
    %c1_53 = arith.constant 1 : index
    %c0_54 = arith.constant 0 : index
    %60 = vector.load %arg12[%c0_52, %c1_53, %c0_54] : memref<2x18x128xbf16, #tpu.memory_space<vmem>>, vector<2x16x128xbf16>
    %61 = vector.shape_cast %60 : vector<2x16x128xbf16> to vector<32x128xbf16>
    %c1_55 = arith.constant 1 : index
    %c0_56 = arith.constant 0 : index
    %c0_57 = arith.constant 0 : index
    %62 = vector.load %arg6[%c1_55, %c0_56, %c0_57] : memref<3x128x128xbf16, #tpu.memory_space<vmem>>, vector<1x128x128xbf16>
    %63 = vector.shape_cast %62 : vector<1x128x128xbf16> to vector<128x128xbf16>
    %cst_58 = arith.constant dense<0.000000e+00> : vector<32x128xf32>
    %64 = tpu.matmul %61, %63, %cst_58 {dimension_numbers = #tpu.dot_dimension_numbers<[1], [0], [0], [1], [0, 0, 1, 1], [], []>} : vector<32x128xbf16>, vector<128x128xbf16>, vector<32x128xf32> -> vector<32x128xf32>
    %65 = arith.addf %59, %64 : vector<32x128xf32>
    %c0_59 = arith.constant 0 : index
    %c2_60 = arith.constant 2 : index
    %c0_61 = arith.constant 0 : index
    %66 = vector.load %arg12[%c0_59, %c2_60, %c0_61] : memref<2x18x128xbf16, #tpu.memory_space<vmem>>, vector<2x16x128xbf16>
    %67 = vector.shape_cast %66 : vector<2x16x128xbf16> to vector<32x128xbf16>
    %c2_62 = arith.constant 2 : index
    %c0_63 = arith.constant 0 : index
    %c0_64 = arith.constant 0 : index
    %68 = vector.load %arg6[%c2_62, %c0_63, %c0_64] : memref<3x128x128xbf16, #tpu.memory_space<vmem>>, vector<1x128x128xbf16>
    %69 = vector.shape_cast %68 : vector<1x128x128xbf16> to vector<128x128xbf16>
    %cst_65 = arith.constant dense<0.000000e+00> : vector<32x128xf32>
    %70 = tpu.matmul %67, %69, %cst_65 {dimension_numbers = #tpu.dot_dimension_numbers<[1], [0], [0], [1], [0, 0, 1, 1], [], []>} : vector<32x128xbf16>, vector<128x128xbf16>, vector<32x128xf32> -> vector<32x128xf32>
    %71 = arith.addf %65, %70 : vector<32x128xf32>
    %c0_66 = arith.constant 0 : index
    %c0_67 = arith.constant 0 : index
    %72 = vector.load %arg7[%c0_66, %c0_67] : memref<8x128xf32, #tpu.memory_space<vmem>>, vector<8x128xf32>
    %c0_68 = arith.constant 0 : index
    %c0_69 = arith.constant 0 : index
    %73 = vector.load %arg8[%c0_68, %c0_69] : memref<128x8xf32, #tpu.memory_space<vmem>>, vector<128x8xf32>
    %c0_70 = arith.constant 0 : index
    %c0_71 = arith.constant 0 : index
    %74 = vector.load %arg9[%c0_70, %c0_71] : memref<1x8xf32, #tpu.memory_space<vmem>>, vector<1x8xf32>
    %c0_72 = arith.constant 0 : index
    %c0_73 = arith.constant 0 : index
    %75 = vector.load %arg10[%c0_72, %c0_73] : memref<1x8xf32, #tpu.memory_space<vmem>>, vector<1x8xf32>
    %cst_74 = arith.constant dense<0.000000e+00> : vector<128xf32>
    %76 = vector.multi_reduction <add>, %71, %cst_74 [0] : vector<32x128xf32> to vector<128xf32>
    %77 = vector.shape_cast %76 : vector<128xf32> to vector<1x128xf32>
    %78 = arith.mulf %71, %71 : vector<32x128xf32>
    %cst_75 = arith.constant dense<0.000000e+00> : vector<128xf32>
    %79 = vector.multi_reduction <add>, %78, %cst_75 [0] : vector<32x128xf32> to vector<128xf32>
    %80 = vector.shape_cast %79 : vector<128xf32> to vector<1x128xf32>
    %cst_76 = arith.constant dense<0.000000e+00> : vector<1x8xf32>
    %81 = tpu.matmul %77, %73, %cst_76 {dimension_numbers = #tpu.dot_dimension_numbers<[1], [0], [0], [1], [0, 0, 1, 1], [], []>} : vector<1x128xf32>, vector<128x8xf32>, vector<1x8xf32> -> vector<1x8xf32>
    %cst_77 = arith.constant dense<0.000000e+00> : vector<1x8xf32>
    %82 = tpu.matmul %80, %73, %cst_77 {dimension_numbers = #tpu.dot_dimension_numbers<[1], [0], [0], [1], [0, 0, 1, 1], [], []>} : vector<1x128xf32>, vector<128x8xf32>, vector<1x8xf32> -> vector<1x8xf32>
    %cst_78 = arith.constant 0.001953125 : f32
    %83 = vector.broadcast %cst_78 : f32 to vector<1x8xf32>
    %84 = arith.mulf %81, %83 : vector<1x8xf32>
    %cst_79 = arith.constant 0.001953125 : f32
    %85 = vector.broadcast %cst_79 : f32 to vector<1x8xf32>
    %86 = arith.mulf %82, %85 : vector<1x8xf32>
    %87 = arith.mulf %84, %84 : vector<1x8xf32>
    %88 = arith.subf %86, %87 : vector<1x8xf32>
    %cst_80 = arith.constant 9.99999974E-6 : f32
    %89 = vector.broadcast %cst_80 : f32 to vector<1x8xf32>
    %90 = arith.addf %88, %89 : vector<1x8xf32>
    %91 = math.rsqrt %90 : vector<1x8xf32>
    %92 = arith.mulf %74, %91 : vector<1x8xf32>
    %93 = arith.mulf %84, %92 : vector<1x8xf32>
    %94 = arith.subf %75, %93 : vector<1x8xf32>
    %cst_81 = arith.constant dense<0.000000e+00> : vector<1x128xf32>
    %95 = tpu.matmul %92, %72, %cst_81 {dimension_numbers = #tpu.dot_dimension_numbers<[1], [0], [0], [1], [0, 0, 1, 1], [], []>} : vector<1x8xf32>, vector<8x128xf32>, vector<1x128xf32> -> vector<1x128xf32>
    %cst_82 = arith.constant dense<0.000000e+00> : vector<1x128xf32>
    %96 = tpu.matmul %94, %72, %cst_82 {dimension_numbers = #tpu.dot_dimension_numbers<[1], [0], [0], [1], [0, 0, 1, 1], [], []>} : vector<1x8xf32>, vector<8x128xf32>, vector<1x128xf32> -> vector<1x128xf32>
    %97 = vector.broadcast %95 : vector<1x128xf32> to vector<32x128xf32>
    %98 = arith.mulf %71, %97 : vector<32x128xf32>
    %99 = vector.broadcast %96 : vector<1x128xf32> to vector<32x128xf32>
    %100 = arith.addf %98, %99 : vector<32x128xf32>
    %cst_83 = arith.constant 0.000000e+00 : f32
    %101 = vector.broadcast %cst_83 : f32 to vector<32x128xf32>
    %102 = arith.maximumf %100, %101 : vector<32x128xf32>
    %c0_84 = arith.constant 0 : index
    %c0_85 = arith.constant 0 : index
    %103 = vector.load %arg11[%c0_84, %c0_85] : memref<32x128xf32, #tpu.memory_space<vmem>>, vector<32x128xf32>
    tpu.vector_store %arg11[%c0_84, %c0_85], %102 {strides = array<i32>} : memref<32x128xf32, #tpu.memory_space<vmem>>, vector<32x128xf32>,
    return
  }
}

</mosaic_0001>

<llo_original>
// kernel: conv_block_forward.1
$region0: #{conv_block_forward.1}
  #allocation0 [shape = 'u32[]', space=smem, size = 0x4, offset = 0x4, fixed_abs, tag = 'smem constant byte address 0x4 - core index']
  #allocation1 [shape = 'u32[144,128]{1,0:T(1,128)}', space=vmem, size = 0x12000, scoped, tag = 'internal scratch']
  #allocation2 [shape = 'bf16[2,18,128]{2,1,0:T(8,128)(2,1)}', space=vmem, size = 0x3000, scoped, tag = 'scratch operand']
  %s0 = inlined_call_operand.vmem [shape: bf16[2,18,64], index: 0, kind: input, shape index: {}]
  %s1 = inlined_call_operand.vmem [shape: bf16[3,64,128], index: 1, kind: input, shape index: {}]
  %s2 = inlined_call_operand.vmem [shape: f32[8,128], index: 2, kind: input, shape index: {}, may-alias: {2,7}]
  %s3 = inlined_call_operand.vmem [shape: f32[128,8], index: 3, kind: input, shape index: {}, may-alias: {3,8}]
  %s4 = inlined_call_operand.vmem [shape: f32[1,8], index: 4, kind: input, shape index: {}]
  %s5 = inlined_call_operand.vmem [shape: f32[1,8], index: 5, kind: input, shape index: {}]
  %s6 = inlined_call_operand.vmem [shape: bf16[3,128,128], index: 6, kind: input, shape index: {}]
  %s7 = inlined_call_operand.vmem [shape: f32[8,128], index: 7, kind: input, shape index: {}, may-alias: {2,7}]
  %s8 = inlined_call_operand.vmem [shape: f32[128,8], index: 8, kind: input, shape index: {}, may-alias: {3,8}]
  %s9 = inlined_call_operand.vmem [shape: f32[1,8], index: 9, kind: input, shape index: {}]
  %s10 = inlined_call_operand.vmem [shape: f32[1,8], index: 10, kind: input, shape index: {}]
  %s11 = inlined_call_operand.vmem [shape: f32[32,128], index: 11, kind: output, shape index: {}]
  %s12 = sld [smem:[#allocation0]]
  $region54: #{conv_block_forward.1} parent=0
    _
  %s14 = ssub.s32 1, %s12
  %s15 = scalar_select 0, %s14, %s12
  // Predicated region
  $region2: #{conv_block_forward.1} parent=0 // pred_check
    _
  $region3: #{conv_block_forward.1} parent=0 // pred_check_branch
    %17 = sbr.rel (0) target = $region5
  $region4: #{conv_block_forward.1} parent=0 // pred_region
    _
  $region5: #{conv_block_forward.1} parent=0 // pred_fallthru
    _
  // Predicated region
  $region6: #{conv_block_forward.1} parent=0 // pred_check
    _
  $region7: #{conv_block_forward.1} parent=0 // pred_check_branch
    %19 = sbr.rel (0) target = $region9
  $region8: #{conv_block_forward.1} parent=0 // pred_region
    _
  $region9: #{conv_block_forward.1} parent=0 // pred_fallthru
    _
  // Predicated region
  $region10: #{conv_block_forward.1} parent=0 // pred_check
    _
  $region11: #{conv_block_forward.1} parent=0 // pred_check_branch
    %21 = sbr.rel (0) target = $region13
  $region12: #{conv_block_forward.1} parent=0 // pred_region
    _
  $region13: #{conv_block_forward.1} parent=0 // pred_fallthru
    _
  // Predicated region
  $region14: #{conv_block_forward.1} parent=0 // pred_check
    _
  $region15: #{conv_block_forward.1} parent=0 // pred_check_branch
    %23 = sbr.rel (0) target = $region17
  $region16: #{conv_block_forward.1} parent=0 // pred_region
    _
  $region17: #{conv_block_forward.1} parent=0 // pred_fallthru
    _
  // Predicated region
  $region18: #{conv_block_forward.1} parent=0 // pred_check
    _
  $region19: #{conv_block_forward.1} parent=0 // pred_check_branch
    %25 = sbr.rel (0) target = $region21
  $region20: #{conv_block_forward.1} parent=0 // pred_region
    _
  $region21: #{conv_block_forward.1} parent=0 // pred_fallthru
    _
  // Predicated region
  $region22: #{conv_block_forward.1} parent=0 // pred_check
    _
  $region23: #{conv_block_forward.1} parent=0 // pred_check_branch
    %27 = sbr.rel (0) target = $region25
  $region24: #{conv_block_forward.1} parent=0 // pred_region
    _
  $region25: #{conv_block_forward.1} parent=0 // pred_fallthru
    _
  // Predicated region
  $region26: #{conv_block_forward.1} parent=0 // pred_check
    _
  $region27: #{conv_block_forward.1} parent=0 // pred_check_branch
    %29 = sbr.rel (0) target = $region29
  $region28: #{conv_block_forward.1} parent=0 // pred_region
    _
  $region29: #{conv_block_forward.1} parent=0 // pred_fallthru
    _
  // Predicated region
  $region30: #{conv_block_forward.1} parent=0 // pred_check
    _
  $region31: #{conv_block_forward.1} parent=0 // pred_check_branch
    %31 = sbr.rel (0) target = $region33
  $region32: #{conv_block_forward.1} parent=0 // pred_region
    _
  $region33: #{conv_block_forward.1} parent=0 // pred_fallthru
    _
  // Predicated region
  $region34: #{conv_block_forward.1} parent=0 // pred_check
    _
  $region35: #{conv_block_forward.1} parent=0 // pred_check_branch
    %33 = sbr.rel (0) target = $region37
  $region36: #{conv_block_forward.1} parent=0 // pred_region
    _
  $region37: #{conv_block_forward.1} parent=0 // pred_fallthru
    _
  // Predicated region
  $region38: #{conv_block_forward.1} parent=0 // pred_check
    _
  $region39: #{conv_block_forward.1} parent=0 // pred_check_branch
    %35 = sbr.rel (0) target = $region41
  $region40: #{conv_block_forward.1} parent=0 // pred_region
    _
  $region41: #{conv_block_forward.1} parent=0 // pred_fallthru
    _
  // Predicated region
  $region42: #{conv_block_forward.1} parent=0 // pred_check
    _
  $region43: #{conv_block_forward.1} parent=0 // pred_check_branch
    %37 = sbr.rel (0) target = $region45
  $region44: #{conv_block_forward.1} parent=0 // pred_region
    _
  $region45: #{conv_block_forward.1} parent=0 // pred_fallthru
    _
  %v39 = vld [vmem:[%s0] sm:$0xf]
  %v40 = vld [vmem:[%s0 + $0x4] sm:$0xf]
  %v41 = vld [vmem:[%s0 + $0xc] sm:$0xf]
  %v42 = vld [vmem:[%s0 + $0x10] sm:$0xf]
  %v43 = vld [vmem:[%s1] sm:$0xf]
  %v44 = vld [vmem:[%s1 + $0x4] sm:$0xf]
  %v45 = vld [vmem:[%s1 + $0x8] sm:$0xf]
  %v46 = vld [vmem:[%s1 + $0xc] sm:$0xf]
  %v47 = vld [vmem:[%s1 + $0x10] sm:$0xf]
  %v48 = vld [vmem:[%s1 + $0x14] sm:$0xf]
  %v49 = vld [vmem:[%s1 + $0x18] sm:$0xf]
  %v50 = vld [vmem:[%s1 + $0x1c] sm:$0xf]
  %v51 = vld [vmem:[%s0 + $0x8] sm:$0x1]
  %v52 = vld [vmem:[%s0 + $0x14] sm:$0x1]
  %vm53 = vsmask.f32 3328
  %vm54 = vsmask.f32 7440
  %vm55 = vmor %vm53, %vm54
  %v57 = vshrl.u32 %v39, 16
  %v59 = vrot.slane %v57, 4
  %v60 = vshll.u32 %v39, 16
  %v62 = vrot.slane %v60, 5
  %v63 = vor.u32 %v59, %v62
  %v64 = vrot.slane %v63, 4
  %v66 = vshll.u32 %v40, 16
  %v68 = vrot.slane %v66, 5
  %v69 = vsel %vm55, %v64, %v68
  %v70 = vshrl.u32 %v40, 16
  %v72 = vrot.slane %v70, 4
  %v73 = vor.u32 %v72, %v68
  %v74 = vrot.slane %v73, 4
  %v76 = vshll.u32 %v51, 16
  %v78 = vrot.slane %v76, 5
  %v79 = vsel %vm55, %v74, %v78
  %v81 = vshrl.u32 %v41, 16
  %v83 = vrot.slane %v81, 4
  %v84 = vshll.u32 %v41, 16
  %v86 = vrot.slane %v84, 5
  %v87 = vor.u32 %v83, %v86
  %v88 = vrot.slane %v87, 4
  %v90 = vshll.u32 %v42, 16
  %v92 = vrot.slane %v90, 5
  %v93 = vsel %vm55, %v88, %v92
  %v94 = vshrl.u32 %v42, 16
  %v96 = vrot.slane %v94, 4
  %v97 = vor.u32 %v96, %v92
  %v98 = vrot.slane %v97, 4
  %v100 = vshll.u32 %v52, 16
  %v102 = vrot.slane %v100, 5
  %v103 = vsel %vm55, %v98, %v102
  %s104 = scalar_lea.vmem %s1, 32
  %v105 = vld [vmem:[%s104] sm:$0xf]
  %v106 = vld [vmem:[%s104 + $0x4] sm:$0xf]
  %v107 = vld [vmem:[%s104 + $0x8] sm:$0xf]
  %v108 = vld [vmem:[%s104 + $0xc] sm:$0xf]
  %v109 = vld [vmem:[%s104 + $0x10] sm:$0xf]
  %v110 = vld [vmem:[%s104 + $0x14] sm:$0xf]
  %v111 = vld [vmem:[%s104 + $0x18] sm:$0xf]
  %v112 = vld [vmem:[%s104 + $0x1c] sm:$0xf]
  %v113 = vunpack.c.l.b16 %v69
  %v114 = vunpack.c.l.b16 %v79
  %v115 = vunpack.c.l.b16 %v93
  %v116 = vunpack.c.l.b16 %v103
  %v117 = vpack.c.b16 %v114, %v113
  %v118 = vpack.c.b16 %v116, %v115
  %v127 = vunpack.c.l.b16 %v105
  %v128 = vunpack.c.l.b16 %v106
  %v129 = vunpack.c.l.b16 %v107
  %v130 = vunpack.c.l.b16 %v108
  %v131 = vunpack.c.l.b16 %v109
  %v132 = vunpack.c.l.b16 %v110
  %v133 = vunpack.c.l.b16 %v111
  %v134 = vunpack.c.l.b16 %v112
  %v135 = vpack.c.b16 %v128, %v127
  %v136 = vpack.c.b16 %v130, %v129
  %v137 = vpack.c.b16 %v132, %v131
  %v138 = vpack.c.b16 %v134, %v133
  %vm143 = vcmask 523264
  %v145 = vsel %vm143, %v117, 0
  %v148 = vsel %vm143, %v118, 0
  %150 = vmatprep.subr.bf16.mxu0 0
  %151 = vmatpush1.bf16.msra.mxu0 %v135
  %152 = vmatprep.subr.bf16.mxu0 0
  %153 = vmatpush1.bf16.msra.mxu0 %v136
  %154 = vmatprep.subr.bf16.mxu0 0
  %155 = vmatpush1.bf16.msra.mxu0 %v137
  %156 = vmatprep.subr.bf16.mxu0 0
  %157 = vmatpush1.bf16.msra.mxu0 %v138
  %158 = vmatprep.subr.bf16.mxu0 0
  %159 = vmatpush1.bf16.msra.mxu0 0
  %160 = vmatprep.subr.bf16.mxu0 0
  %161 = vmatpush1.bf16.msra.mxu0 0
  %162 = vmatprep.subr.bf16.mxu0 0
  %163 = vmatpush1.bf16.msra.mxu0 0
  %164 = vmatprep.subr.bf16.mxu0 0
  %165 = vmatpush1.bf16.msra.mxu0 0
  %166 = vmatprep.subr.bf16.mxu0 0
  %167 = vmatpush1.bf16.msra.mxu0 0
  %168 = vmatprep.subr.bf16.mxu0 0
  %169 = vmatpush1.bf16.msra.mxu0 0
  %170 = vmatprep.subr.bf16.mxu0 0
  %171 = vmatpush1.bf16.msra.mxu0 0
  %172 = vmatprep.subr.bf16.mxu0 0
  %173 = vmatpush1.bf16.msra.mxu0 0
  %174 = vmatprep.subr.bf16.mxu0 0
  %175 = vmatpush1.bf16.msra.mxu0 0
  %176 = vmatprep.subr.bf16.mxu0 0
  %177 = vmatpush1.bf16.msra.mxu0 0
  %178 = vmatprep.subr.bf16.mxu0 0
  %179 = vmatpush1.bf16.msra.mxu0 0
  %180 = vmatprep.subr.bf16.mxu0 0
  %181 = vmatpush1.bf16.msra.mxu0 0
  %182 = vmatprep.mubr.bf16.mxu0 0
  %183 = vmatmul.mubr.bf16.gmra.mrb[0].mxu0 %v145
  %v184 = vpop.f32.mrb[0].mxu0
  %v185 = vadd.f32 0.0, %v184
  %v186 = vpop.f32.mrb[0].mxu0
  %v187 = vpop.f32.mrb[0].mxu0
  %v188 = vadd.f32 0.0, %v187
  %v189 = vpop.f32.mrb[0].mxu0
  %190 = vmatprep.mubr.bf16.mxu0 0
  %191 = vmatmul.mubr.bf16.gmra.mrb[0].mxu0 %v148
  %v192 = vpop.f32.mrb[0].mxu0
  %v193 = vadd.f32 0.0, %v192
  %v194 = vpop.f32.mrb[0].mxu0
  %v195 = vpop.f32.mrb[0].mxu0
  %v196 = vadd.f32 0.0, %v195
  %v197 = vpop.f32.mrb[0].mxu0
  %198 = vdwg.mxu0
  %v203 = vunpack.c.l.b16 %v39
  %v204 = vunpack.c.l.b16 %v40
  %v205 = vunpack.c.l.b16 %v41
  %v206 = vunpack.c.l.b16 %v42
  %v207 = vpack.c.b16 %v204, %v203
  %v208 = vpack.c.b16 %v206, %v205
  %v217 = vunpack.c.l.b16 %v43
  %v218 = vunpack.c.l.b16 %v44
  %v219 = vunpack.c.l.b16 %v45
  %v220 = vunpack.c.l.b16 %v46
  %v221 = vunpack.c.l.b16 %v47
  %v222 = vunpack.c.l.b16 %v48
  %v223 = vunpack.c.l.b16 %v49
  %v224 = vunpack.c.l.b16 %v50
  %v225 = vpack.c.b16 %v218, %v217
  %v226 = vpack.c.b16 %v220, %v219
  %v227 = vpack.c.b16 %v222, %v221
  %v228 = vpack.c.b16 %v224, %v223
  %v234 = vsel %vm143, %v207, 0
  %v237 = vsel %vm143, %v208, 0
  %239 = vmatprep.subr.bf16.mxu0 0
  %240 = vmatpush1.bf16.msra.mxu0 %v225
  %241 = vmatprep.subr.bf16.mxu0 0
  %242 = vmatpush1.bf16.msra.mxu0 %v226
  %243 = vmatprep.subr.bf16.mxu0 0
  %244 = vmatpush1.bf16.msra.mxu0 %v227
  %245 = vmatprep.subr.bf16.mxu0 0
  %246 = vmatpush1.bf16.msra.mxu0 %v228
  %247 = vmatprep.subr.bf16.mxu0 0
  %248 = vmatpush1.bf16.msra.mxu0 0
  %249 = vmatprep.subr.bf16.mxu0 0
  %250 = vmatpush1.bf16.msra.mxu0 0
  %251 = vmatprep.subr.bf16.mxu0 0
  %252 = vmatpush1.bf16.msra.mxu0 0
  %253 = vmatprep.subr.bf16.mxu0 0
  %254 = vmatpush1.bf16.msra.mxu0 0
  %255 = vmatprep.subr.bf16.mxu0 0
  %256 = vmatpush1.bf16.msra.mxu0 0
  %257 = vmatprep.subr.bf16.mxu0 0
  %258 = vmatpush1.bf16.msra.mxu0 0
  %259 = vmatprep.subr.bf16.mxu0 0
  %260 = vmatpush1.bf16.msra.mxu0 0
  %261 = vmatprep.subr.bf16.mxu0 0
  %262 = vmatpush1.bf16.msra.mxu0 0
  %263 = vmatprep.subr.bf16.mxu0 0
  %264 = vmatpush1.bf16.msra.mxu0 0
  %265 = vmatprep.subr.bf16.mxu0 0
  %266 = vmatpush1.bf16.msra.mxu0 0
  %267 = vmatprep.subr.bf16.mxu0 0
  %268 = vmatpush1.bf16.msra.mxu0 0
  %269 = vmatprep.subr.bf16.mxu0 0
  %270 = vmatpush1.bf16.msra.mxu0 0
  %271 = vmatprep.mubr.bf16.mxu0 0
  %272 = vmatmul.mubr.bf16.gmra.mrb[0].mxu0 %v234
  %v273 = vpop.f32.mrb[0].mxu0
  %v274 = vadd.f32 %v185, %v273
  %v275 = vpop.f32.mrb[0].mxu0
  %v276 = vpop.f32.mrb[0].mxu0
  %v277 = vadd.f32 %v188, %v276
  %v278 = vpop.f32.mrb[0].mxu0
  %279 = vmatprep.mubr.bf16.mxu0 0
  %280 = vmatmul.mubr.bf16.gmra.mrb[0].mxu0 %v237
  %v281 = vpop.f32.mrb[0].mxu0
  %v282 = vadd.f32 %v193, %v281
  %v283 = vpop.f32.mrb[0].mxu0
  %v284 = vpop.f32.mrb[0].mxu0
  %v285 = vadd.f32 %v196, %v284
  %v286 = vpop.f32.mrb[0].mxu0
  %287 = vdwg.mxu0
  %v288 = vld [vmem:[%s0] sm:$0xe]
  %v289 = vld [vmem:[%s0 + $0xc] sm:$0xe]
  %vm294 = vcmask 1042432
  %vm295 = vcmask 1046532
  %vm296 = vmor %vm294, %vm295
  %v297 = vrot.slane %v288, 5
  %v298 = vrot.slane %v297, 4
  %v299 = vrot.slane %v40, 5
  %v300 = vsel %vm296, %v298, %v299
  %v301 = vrot.slane %v299, 4
  %v302 = vrot.slane %v51, 5
  %v303 = vsel %vm296, %v301, %v302
  %v304 = vrot.slane %v289, 5
  %v305 = vrot.slane %v304, 4
  %v306 = vrot.slane %v42, 5
  %v307 = vsel %vm296, %v305, %v306
  %v308 = vrot.slane %v306, 4
  %v309 = vrot.slane %v52, 5
  %v310 = vsel %vm296, %v308, %v309
  %s311 = scalar_lea.vmem %s1, 64
  %v312 = vld [vmem:[%s311] sm:$0xf]
  %v313 = vld [vmem:[%s311 + $0x4] sm:$0xf]
  %v314 = vld [vmem:[%s311 + $0x8] sm:$0xf]
  %v315 = vld [vmem:[%s311 + $0xc] sm:$0xf]
  %v316 = vld [vmem:[%s311 + $0x10] sm:$0xf]
  %v317 = vld [vmem:[%s311 + $0x14] sm:$0xf]
  %v318 = vld [vmem:[%s311 + $0x18] sm:$0xf]
  %v319 = vld [vmem:[%s311 + $0x1c] sm:$0xf]
  %v320 = vunpack.c.l.b16 %v300
  %v321 = vunpack.c.l.b16 %v303
  %v322 = vunpack.c.l.b16 %v307
  %v323 = vunpack.c.l.b16 %v310
  %v324 = vpack.c.b16 %v321, %v320
  %v325 = vpack.c.b16 %v323, %v322
  %v334 = vunpack.c.l.b16 %v312
  %v335 = vunpack.c.l.b16 %v313
  %v336 = vunpack.c.l.b16 %v314
  %v337 = vunpack.c.l.b16 %v315
  %v338 = vunpack.c.l.b16 %v316
  %v339 = vunpack.c.l.b16 %v317
  %v340 = vunpack.c.l.b16 %v318
  %v341 = vunpack.c.l.b16 %v319
  %v342 = vpack.c.b16 %v335, %v334
  %v343 = vpack.c.b16 %v337, %v336
  %v344 = vpack.c.b16 %v339, %v338
  %v345 = vpack.c.b16 %v341, %v340
  %v351 = vsel %vm143, %v324, 0
  %v354 = vsel %vm143, %v325, 0
  %356 = vmatprep.subr.bf16.mxu0 0
  %357 = vmatpush1.bf16.msra.mxu0 %v342
  %358 = vmatprep.subr.bf16.mxu0 0
  %359 = vmatpush1.bf16.msra.mxu0 %v343
  %360 = vmatprep.subr.bf16.mxu0 0
  %361 = vmatpush1.bf16.msra.mxu0 %v344
  %362 = vmatprep.subr.bf16.mxu0 0
  %363 = vmatpush1.bf16.msra.mxu0 %v345
  %364 = vmatprep.subr.bf16.mxu0 0
  %365 = vmatpush1.bf16.msra.mxu0 0
  %366 = vmatprep.subr.bf16.mxu0 0
  %367 = vmatpush1.bf16.msra.mxu0 0
  %368 = vmatprep.subr.bf16.mxu0 0
  %369 = vmatpush1.bf16.msra.mxu0 0
  %370 = vmatprep.subr.bf16.mxu0 0
  %371 = vmatpush1.bf16.msra.mxu0 0
  %372 = vmatprep.subr.bf16.mxu0 0
  %373 = vmatpush1.bf16.msra.mxu0 0
  %374 = vmatprep.subr.bf16.mxu0 0
  %375 = vmatpush1.bf16.msra.mxu0 0
  %376 = vmatprep.subr.bf16.mxu0 0
  %377 = vmatpush1.bf16.msra.mxu0 0
  %378 = vmatprep.subr.bf16.mxu0 0
  %379 = vmatpush1.bf16.msra.mxu0 0
  %380 = vmatprep.subr.bf16.mxu0 0
  %381 = vmatpush1.bf16.msra.mxu0 0
  %382 = vmatprep.subr.bf16.mxu0 0
  %383 = vmatpush1.bf16.msra.mxu0 0
  %384 = vmatprep.subr.bf16.mxu0 0
  %385 = vmatpush1.bf16.msra.mxu0 0
  %386 = vmatprep.subr.bf16.mxu0 0
  %387 = vmatpush1.bf16.msra.mxu0 0
  %388 = vmatprep.mubr.bf16.mxu0 0
  %389 = vmatmul.mubr.bf16.gmra.mrb[0].mxu0 %v351
  %v390 = vpop.f32.mrb[0].mxu0
  %v391 = vadd.f32 0.0, %v390
  %v392 = vpop.f32.mrb[0].mxu0
  %v393 = vpop.f32.mrb[0].mxu0
  %v394 = vadd.f32 0.0, %v393
  %v395 = vpop.f32.mrb[0].mxu0
  %396 = vmatprep.mubr.bf16.mxu0 0
  %397 = vmatmul.mubr.bf16.gmra.mrb[0].mxu0 %v354
  %v398 = vpop.f32.mrb[0].mxu0
  %v399 = vadd.f32 0.0, %v398
  %v400 = vpop.f32.mrb[0].mxu0
  %v401 = vpop.f32.mrb[0].mxu0
  %v402 = vadd.f32 0.0, %v401
  %v403 = vpop.f32.mrb[0].mxu0
  %404 = vdwg.mxu0
  %v405 = vadd.f32 %v274, %v391
  %v406 = vadd.f32 %v277, %v394
  %v407 = vadd.f32 %v282, %v399
  %v408 = vadd.f32 %v285, %v402
  %v409 = vld [vmem:[%s2] sm:$0xff]
  %v410 = vld [vmem:[%s3] sm:$0xff]
  %v411 = vld [vmem:[%s3 + $0x8] sm:$0xff]
  %v412 = vld [vmem:[%s3 + $0x10] sm:$0xff]
  %v413 = vld [vmem:[%s3 + $0x18] sm:$0xff]
  %v414 = vld [vmem:[%s3 + $0x20] sm:$0xff]
  %v415 = vld [vmem:[%s3 + $0x28] sm:$0xff]
  %v416 = vld [vmem:[%s3 + $0x30] sm:$0xff]
  %v417 = vld [vmem:[%s3 + $0x38] sm:$0xff]
  %v418 = vld [vmem:[%s3 + $0x40] sm:$0xff]
  %v419 = vld [vmem:[%s3 + $0x48] sm:$0xff]
  %v420 = vld [vmem:[%s3 + $0x50] sm:$0xff]
  %v421 = vld [vmem:[%s3 + $0x58] sm:$0xff]
  %v422 = vld [vmem:[%s3 + $0x60] sm:$0xff]
  %v423 = vld [vmem:[%s3 + $0x68] sm:$0xff]
  %v424 = vld [vmem:[%s3 + $0x70] sm:$0xff]
  %v425 = vld [vmem:[%s3 + $0x78] sm:$0xff]
  %v426 = vld [vmem:[%s4] sm:$0x1]
  %v427 = vld [vmem:[%s5] sm:$0x1]
  %v428 = vadd.f32 %v405, %v406
  %v429 = vadd.f32 %v428, %v407
  %v430 = vadd.f32 %v429, %v408
  %v431 = vrot.slane %v430, 4
  %v432 = vadd.f32 %v430, %v431
  %v433 = vrot.slane %v432, 2
  %v434 = vadd.f32 %v432, %v433
  %v435 = vrot.slane %v434, 1
  %v436 = vadd.f32 %v434, %v435
  %v437 = vmul.f32 %v405, %v405
  %v438 = vmul.f32 %v406, %v406
  %v439 = vmul.f32 %v407, %v407
  %v440 = vmul.f32 %v408, %v408
  %v441 = vadd.f32 %v437, %v438
  %v442 = vadd.f32 %v441, %v439
  %v443 = vadd.f32 %v442, %v440
  %v444 = vrot.slane %v443, 4
  %v445 = vadd.f32 %v443, %v444
  %v446 = vrot.slane %v445, 2
  %v447 = vadd.f32 %v445, %v446
  %v448 = vrot.slane %v447, 1
  %v449 = vadd.f32 %v447, %v448
  %450 = vmatprep.subr.mxu0 0.0
  %451 = vmatpush1.msra.mxu0 %v410
  %452 = vmatprep.subr.mxu0 0.0
  %453 = vmatpush1.msra.mxu0 %v411
  %454 = vmatprep.subr.mxu0 0.0
  %455 = vmatpush1.msra.mxu0 %v412
  %456 = vmatprep.subr.mxu0 0.0
  %457 = vmatpush1.msra.mxu0 %v413
  %458 = vmatprep.subr.mxu0 0.0
  %459 = vmatpush1.msra.mxu0 %v414
  %460 = vmatprep.subr.mxu0 0.0
  %461 = vmatpush1.msra.mxu0 %v415
  %462 = vmatprep.subr.mxu0 0.0
  %463 = vmatpush1.msra.mxu0 %v416
  %464 = vmatprep.subr.mxu0 0.0
  %465 = vmatpush1.msra.mxu0 %v417
  %466 = vmatprep.subr.mxu0 0.0
  %467 = vmatpush1.msra.mxu0 %v418
  %468 = vmatprep.subr.mxu0 0.0
  %469 = vmatpush1.msra.mxu0 %v419
  %470 = vmatprep.subr.mxu0 0.0
  %471 = vmatpush1.msra.mxu0 %v420
  %472 = vmatprep.subr.mxu0 0.0
  %473 = vmatpush1.msra.mxu0 %v421
  %474 = vmatprep.subr.mxu0 0.0
  %475 = vmatpush1.msra.mxu0 %v422
  %476 = vmatprep.subr.mxu0 0.0
  %477 = vmatpush1.msra.mxu0 %v423
  %478 = vmatprep.subr.mxu0 0.0
  %479 = vmatpush1.msra.mxu0 %v424
  %480 = vmatprep.subr.mxu0 0.0
  %481 = vmatpush1.msra.mxu0 %v425
  %482 = vmatprep.subr.mxu0 0.0
  %483 = vmatpush1.msra.mxu0 0.0
  %484 = vmatprep.subr.mxu0 0.0
  %485 = vmatpush1.msra.mxu0 0.0
  %486 = vmatprep.subr.mxu0 0.0
  %487 = vmatpush1.msra.mxu0 0.0
  %488 = vmatprep.subr.mxu0 0.0
  %489 = vmatpush1.msra.mxu0 0.0
  %490 = vmatprep.subr.mxu0 0.0
  %491 = vmatpush1.msra.mxu0 0.0
  %492 = vmatprep.subr.mxu0 0.0
  %493 = vmatpush1.msra.mxu0 0.0
  %494 = vmatprep.subr.mxu0 0.0
  %495 = vmatpush1.msra.mxu0 0.0
  %496 = vmatprep.subr.mxu0 0.0
  %497 = vmatpush1.msra.mxu0 0.0
  %498 = vmatprep.subr.mxu0 0.0
  %499 = vmatpush1.msra.mxu0 0.0
  %500 = vmatprep.subr.mxu0 0.0
  %501 = vmatpush1.msra.mxu0 0.0
  %502 = vmatprep.subr.mxu0 0.0
  %503 = vmatpush1.msra.mxu0 0.0
  %504 = vmatprep.subr.mxu0 0.0
  %505 = vmatpush1.msra.mxu0 0.0
  %506 = vmatprep.subr.mxu0 0.0
  %507 = vmatpush1.msra.mxu0 0.0
  %508 = vmatprep.subr.mxu0 0.0
  %509 = vmatpush1.msra.mxu0 0.0
  %510 = vmatprep.subr.mxu0 0.0
  %511 = vmatpush1.msra.mxu0 0.0
  %512 = vmatprep.subr.mxu0 0.0
  %513 = vmatpush1.msra.mxu0 0.0
  %514 = vmatprep.mubr.f32.mxu0 0.0
  %515 = vmatmul.mubr.f32.gmra.mrb[0].mxu0 %v436
  %v516 = vpop.f32.mrb[0].mxu0
  %v517 = vadd.f32 0.0, %v516
  %v518 = vpop.f32.mrb[0].mxu0
  %519 = vdwg.mxu0
  %520 = vmatprep.subr.mxu0 0.0
  %521 = vmatpush1.msra.mxu0 %v410
  %522 = vmatprep.subr.mxu0 0.0
  %523 = vmatpush1.msra.mxu0 %v411
  %524 = vmatprep.subr.mxu0 0.0
  %525 = vmatpush1.msra.mxu0 %v412
  %526 = vmatprep.subr.mxu0 0.0
  %527 = vmatpush1.msra.mxu0 %v413
  %528 = vmatprep.subr.mxu0 0.0
  %529 = vmatpush1.msra.mxu0 %v414
  %530 = vmatprep.subr.mxu0 0.0
  %531 = vmatpush1.msra.mxu0 %v415
  %532 = vmatprep.subr.mxu0 0.0
  %533 = vmatpush1.msra.mxu0 %v416
  %534 = vmatprep.subr.mxu0 0.0
  %535 = vmatpush1.msra.mxu0 %v417
  %536 = vmatprep.subr.mxu0 0.0
  %537 = vmatpush1.msra.mxu0 %v418
  %538 = vmatprep.subr.mxu0 0.0
  %539 = vmatpush1.msra.mxu0 %v419
  %540 = vmatprep.subr.mxu0 0.0
  %541 = vmatpush1.msra.mxu0 %v420
  %542 = vmatprep.subr.mxu0 0.0
  %543 = vmatpush1.msra.mxu0 %v421
  %544 = vmatprep.subr.mxu0 0.0
  %545 = vmatpush1.msra.mxu0 %v422
  %546 = vmatprep.subr.mxu0 0.0
  %547 = vmatpush1.msra.mxu0 %v423
  %548 = vmatprep.subr.mxu0 0.0
  %549 = vmatpush1.msra.mxu0 %v424
  %550 = vmatprep.subr.mxu0 0.0
  %551 = vmatpush1.msra.mxu0 %v425
  %552 = vmatprep.subr.mxu0 0.0
  %553 = vmatpush1.msra.mxu0 0.0
  %554 = vmatprep.subr.mxu0 0.0
  %555 = vmatpush1.msra.mxu0 0.0
  %556 = vmatprep.subr.mxu0 0.0
  %557 = vmatpush1.msra.mxu0 0.0
  %558 = vmatprep.subr.mxu0 0.0
  %559 = vmatpush1.msra.mxu0 0.0
  %560 = vmatprep.subr.mxu0 0.0
  %561 = vmatpush1.msra.mxu0 0.0
  %562 = vmatprep.subr.mxu0 0.0
  %563 = vmatpush1.msra.mxu0 0.0
  %564 = vmatprep.subr.mxu0 0.0
  %565 = vmatpush1.msra.mxu0 0.0
  %566 = vmatprep.subr.mxu0 0.0
  %567 = vmatpush1.msra.mxu0 0.0
  %568 = vmatprep.subr.mxu0 0.0
  %569 = vmatpush1.msra.mxu0 0.0
  %570 = vmatprep.subr.mxu0 0.0
  %571 = vmatpush1.msra.mxu0 0.0
  %572 = vmatprep.subr.mxu0 0.0
  %573 = vmatpush1.msra.mxu0 0.0
  %574 = vmatprep.subr.mxu0 0.0
  %575 = vmatpush1.msra.mxu0 0.0
  %576 = vmatprep.subr.mxu0 0.0
  %577 = vmatpush1.msra.mxu0 0.0
  %578 = vmatprep.subr.mxu0 0.0
  %579 = vmatpush1.msra.mxu0 0.0
  %580 = vmatprep.subr.mxu0 0.0
  %581 = vmatpush1.msra.mxu0 0.0
  %582 = vmatprep.subr.mxu0 0.0
  %583 = vmatpush1.msra.mxu0 0.0
  %584 = vmatprep.mubr.f32.mxu0 0.0
  %585 = vmatmul.mubr.f32.gmra.mrb[0].mxu0 %v449
  %v586 = vpop.f32.mrb[0].mxu0
  %v587 = vadd.f32 0.0, %v586
  %v588 = vpop.f32.mrb[0].mxu0
  %589 = vdwg.mxu0
  %v590 = vmul.f32 %v517, 0.001953125
  %v591 = vmul.f32 %v587, 0.001953125
  %v592 = vmul.f32 %v590, %v590
  %v593 = vsub.f32 %v591, %v592
  %v594 = vadd.f32 %v593, 1e-05
  %v595 = vrsqrt.pop %v594
  %v596 = vmul.f32 %v426, %v595
  %v597 = vmul.f32 %v590, %v596
  %v598 = vsub.f32 %v427, %v597
  %vm599 = vcmask 64512
  %v601 = vsel %vm599, %v596, 0
  %603 = vmatprep.subr.mxu0 0.0
  %604 = vmatpush1.msra.mxu0 %v409
  %605 = vmatprep.subr.mxu0 0.0
  %606 = vmatpush1.msra.mxu0 0.0
  %607 = vmatprep.subr.mxu0 0.0
  %608 = vmatpush1.msra.mxu0 0.0
  %609 = vmatprep.subr.mxu0 0.0
  %610 = vmatpush1.msra.mxu0 0.0
  %611 = vmatprep.subr.mxu0 0.0
  %612 = vmatpush1.msra.mxu0 0.0
  %613 = vmatprep.subr.mxu0 0.0
  %614 = vmatpush1.msra.mxu0 0.0
  %615 = vmatprep.subr.mxu0 0.0
  %616 = vmatpush1.msra.mxu0 0.0
  %617 = vmatprep.subr.mxu0 0.0
  %618 = vmatpush1.msra.mxu0 0.0
  %619 = vmatprep.subr.mxu0 0.0
  %620 = vmatpush1.msra.mxu0 0.0
  %621 = vmatprep.subr.mxu0 0.0
  %622 = vmatpush1.msra.mxu0 0.0
  %623 = vmatprep.subr.mxu0 0.0
  %624 = vmatpush1.msra.mxu0 0.0
  %625 = vmatprep.subr.mxu0 0.0
  %626 = vmatpush1.msra.mxu0 0.0
  %627 = vmatprep.subr.mxu0 0.0
  %628 = vmatpush1.msra.mxu0 0.0
  %629 = vmatprep.subr.mxu0 0.0
  %630 = vmatpush1.msra.mxu0 0.0
  %631 = vmatprep.subr.mxu0 0.0
  %632 = vmatpush1.msra.mxu0 0.0
  %633 = vmatprep.subr.mxu0 0.0
  %634 = vmatpush1.msra.mxu0 0.0
  %635 = vmatprep.subr.mxu0 0.0
  %636 = vmatpush1.msra.mxu0 0.0
  %637 = vmatprep.subr.mxu0 0.0
  %638 = vmatpush1.msra.mxu0 0.0
  %639 = vmatprep.subr.mxu0 0.0
  %640 = vmatpush1.msra.mxu0 0.0
  %641 = vmatprep.subr.mxu0 0.0
  %642 = vmatpush1.msra.mxu0 0.0
  %643 = vmatprep.subr.mxu0 0.0
  %644 = vmatpush1.msra.mxu0 0.0
  %645 = vmatprep.subr.mxu0 0.0
  %646 = vmatpush1.msra.mxu0 0.0
  %647 = vmatprep.subr.mxu0 0.0
  %648 = vmatpush1.msra.mxu0 0.0
  %649 = vmatprep.subr.mxu0 0.0
  %650 = vmatpush1.msra.mxu0 0.0
  %651 = vmatprep.subr.mxu0 0.0
  %652 = vmatpush1.msra.mxu0 0.0
  %653 = vmatprep.subr.mxu0 0.0
  %654 = vmatpush1.msra.mxu0 0.0
  %655 = vmatprep.subr.mxu0 0.0
  %656 = vmatpush1.msra.mxu0 0.0
  %657 = vmatprep.subr.mxu0 0.0
  %658 = vmatpush1.msra.mxu0 0.0
  %659 = vmatprep.subr.mxu0 0.0
  %660 = vmatpush1.msra.mxu0 0.0
  %661 = vmatprep.subr.mxu0 0.0
  %662 = vmatpush1.msra.mxu0 0.0
  %663 = vmatprep.subr.mxu0 0.0
  %664 = vmatpush1.msra.mxu0 0.0
  %665 = vmatprep.subr.mxu0 0.0
  %666 = vmatpush1.msra.mxu0 0.0
  %667 = vmatprep.mubr.f32.mxu0 0.0
  %668 = vmatmul.mubr.f32.gmra.mrb[0].mxu0 %v601
  %v669 = vpop.f32.mrb[0].mxu0
  %v670 = vadd.f32 0.0, %v669
  %v671 = vpop.f32.mrb[0].mxu0
  %672 = vdwg.mxu0
  %v674 = vsel %vm599, %v598, 0
  %676 = vmatprep.subr.mxu0 0.0
  %677 = vmatpush1.msra.mxu0 %v409
  %678 = vmatprep.subr.mxu0 0.0
  %679 = vmatpush1.msra.mxu0 0.0
  %680 = vmatprep.subr.mxu0 0.0
  %681 = vmatpush1.msra.mxu0 0.0
  %682 = vmatprep.subr.mxu0 0.0
  %683 = vmatpush1.msra.mxu0 0.0
  %684 = vmatprep.subr.mxu0 0.0
  %685 = vmatpush1.msra.mxu0 0.0
  %686 = vmatprep.subr.mxu0 0.0
  %687 = vmatpush1.msra.mxu0 0.0
  %688 = vmatprep.subr.mxu0 0.0
  %689 = vmatpush1.msra.mxu0 0.0
  %690 = vmatprep.subr.mxu0 0.0
  %691 = vmatpush1.msra.mxu0 0.0
  %692 = vmatprep.subr.mxu0 0.0
  %693 = vmatpush1.msra.mxu0 0.0
  %694 = vmatprep.subr.mxu0 0.0
  %695 = vmatpush1.msra.mxu0 0.0
  %696 = vmatprep.subr.mxu0 0.0
  %697 = vmatpush1.msra.mxu0 0.0
  %698 = vmatprep.subr.mxu0 0.0
  %699 = vmatpush1.msra.mxu0 0.0
  %700 = vmatprep.subr.mxu0 0.0
  %701 = vmatpush1.msra.mxu0 0.0
  %702 = vmatprep.subr.mxu0 0.0
  %703 = vmatpush1.msra.mxu0 0.0
  %704 = vmatprep.subr.mxu0 0.0
  %705 = vmatpush1.msra.mxu0 0.0
  %706 = vmatprep.subr.mxu0 0.0
  %707 = vmatpush1.msra.mxu0 0.0
  %708 = vmatprep.subr.mxu0 0.0
  %709 = vmatpush1.msra.mxu0 0.0
  %710 = vmatprep.subr.mxu0 0.0
  %711 = vmatpush1.msra.mxu0 0.0
  %712 = vmatprep.subr.mxu0 0.0
  %713 = vmatpush1.msra.mxu0 0.0
  %714 = vmatprep.subr.mxu0 0.0
  %715 = vmatpush1.msra.mxu0 0.0
  %716 = vmatprep.subr.mxu0 0.0
  %717 = vmatpush1.msra.mxu0 0.0
  %718 = vmatprep.subr.mxu0 0.0
  %719 = vmatpush1.msra.mxu0 0.0
  %720 = vmatprep.subr.mxu0 0.0
  %721 = vmatpush1.msra.mxu0 0.0
  %722 = vmatprep.subr.mxu0 0.0
  %723 = vmatpush1.msra.mxu0 0.0
  %724 = vmatprep.subr.mxu0 0.0
  %725 = vmatpush1.msra.mxu0 0.0
  %726 = vmatprep.subr.mxu0 0.0
  %727 = vmatpush1.msra.mxu0 0.0
  %728 = vmatprep.subr.mxu0 0.0
  %729 = vmatpush1.msra.mxu0 0.0
  %730 = vmatprep.subr.mxu0 0.0
  %731 = vmatpush1.msra.mxu0 0.0
  %732 = vmatprep.subr.mxu0 0.0
  %733 = vmatpush1.msra.mxu0 0.0
  %734 = vmatprep.subr.mxu0 0.0
  %735 = vmatpush1.msra.mxu0 0.0
  %736 = vmatprep.subr.mxu0 0.0
  %737 = vmatpush1.msra.mxu0 0.0
  %738 = vmatprep.subr.mxu0 0.0
  %739 = vmatpush1.msra.mxu0 0.0
  %740 = vmatprep.mubr.f32.mxu0 0.0
  %741 = vmatmul.mubr.f32.gmra.mrb[0].mxu0 %v674
  %v742 = vpop.f32.mrb[0].mxu0
  %v743 = vadd.f32 0.0, %v742
  %v744 = vpop.f32.mrb[0].mxu0
  %745 = vdwg.mxu0
  %v746 = vlaneseq
  %v747 = vshrl.u32 %v746, 7
  %v748 = vsub.s32 0, %v747
  %v749 = vrot.slane %v670, %v748
  %v750 = vmul.f32 %v405, %v749
  %v751 = vmul.f32 %v406, %v749
  %v752 = vmul.f32 %v407, %v749
  %v753 = vmul.f32 %v408, %v749
  %v754 = vlaneseq
  %v755 = vshrl.u32 %v754, 7
  %v756 = vsub.s32 0, %v755
  %v757 = vrot.slane %v743, %v756
  %v758 = vadd.f32 %v750, %v757
  %v759 = vadd.f32 %v751, %v757
  %v760 = vadd.f32 %v752, %v757
  %v761 = vadd.f32 %v753, %v757
  %v762 = vmax.f32 %v758, 0.0
  %v763 = vmax.f32 %v759, 0.0
  %v764 = vmax.f32 %v760, 0.0
  %v765 = vmax.f32 %v761, 0.0
  %vm766 = vcmask 1040384
  %vm767 = vsmask.f32 256
  %vm768 = vmand %vm766, %vm767
  %v769 = vld [vmem:[#allocation2] sm:$0x1]
  %v770 = vsel %vm768, 0, %v769
  %771 = vst [vmem:[#allocation2] sm:$0x1] %v770
  %v772 = vld [vmem:[#allocation2 + $0xc] sm:$0x1]
  %v773 = vsel %vm768, 0, %v772
  %774 = vst [vmem:[#allocation2 + $0xc] sm:$0x1] %v773
  %vm775 = vsmask.f32 7938
  %vm776 = vmand %vm766, %vm775
  %v777 = vld [vmem:[#allocation2 + $0x8] sm:$0x1]
  %v778 = vsel %vm776, 0, %v777
  %779 = vst [vmem:[#allocation2 + $0x8] sm:$0x1] %v778
  %v780 = vld [vmem:[#allocation2 + $0x14] sm:$0x1]
  %v781 = vsel %vm776, 0, %v780
  %782 = vst [vmem:[#allocation2 + $0x14] sm:$0x1] %v781
  %v783 = vpack.c.bf16 %v763, %v762
  %v784 = vpack.c.bf16 %v765, %v764
  %v787 = vunpack.c.l.b16 %v783
  %v788 = vunpack.c.h.b16 %v783
  %v789 = vunpack.c.l.b16 %v784
  %v790 = vunpack.c.h.b16 %v784
  %v791 = vpack.c.b16 %v787, %v787
  %v792 = vpack.c.b16 %v788, %v788
  %v793 = vpack.c.b16 %v789, %v789
  %v794 = vpack.c.b16 %v790, %v790
  %vm795 = vsmask.f32 4368
  %vm796 = vmor %vm767, %vm795
  %v798 = vshrl.u32 %v791, 16
  %v800 = vrot.slane %v798, 7
  %v801 = vshll.u32 %v791, 16
  %v803 = vor.u32 %v800, %v801
  %v804 = vrot.slane %v800, 4
  %v806 = vshrl.u32 %v792, 16
  %v808 = vrot.slane %v806, 7
  %v809 = vshll.u32 %v792, 16
  %v811 = vor.u32 %v808, %v809
  %v812 = vsel %vm796, %v804, %v811
  %v813 = vrot.slane %v808, 4
  %v815 = vshrl.u32 %v793, 16
  %v817 = vrot.slane %v815, 7
  %v818 = vshll.u32 %v793, 16
  %v820 = vor.u32 %v817, %v818
  %v821 = vrot.slane %v817, 4
  %v823 = vshrl.u32 %v794, 16
  %v825 = vrot.slane %v823, 7
  %v826 = vshll.u32 %v794, 16
  %v828 = vor.u32 %v825, %v826
  %v829 = vsel %vm796, %v821, %v828
  %v830 = vrot.slane %v825, 4
  %vm837 = vcmask 1043456
  %vm838 = vmand %vm837, %vm775
  %v839 = vld [vmem:[#allocation2] sm:$0xf]
  %v840 = vsel %vm838, %v803, %v839
  %841 = vst [vmem:[#allocation2] sm:$0xf] %v840
  %842 = vst [vmem:[#allocation2 + $0x4] sm:$0xf] %v812
  %v843 = vld [vmem:[#allocation2 + $0x8] sm:$0x1]
  %v844 = vsel %vm768, %v813, %v843
  %845 = vst [vmem:[#allocation2 + $0x8] sm:$0x1] %v844
  %v846 = vld [vmem:[#allocation2 + $0xc] sm:$0xf]
  %v847 = vsel %vm838, %v820, %v846
  %848 = vst [vmem:[#allocation2 + $0xc] sm:$0xf] %v847
  %849 = vst [vmem:[#allocation2 + $0x10] sm:$0xf] %v829
  %v850 = vld [vmem:[#allocation2 + $0x14] sm:$0x1]
  %v851 = vsel %vm768, %v830, %v850
  %852 = vst [vmem:[#allocation2 + $0x14] sm:$0x1] %v851
  %v853 = vld [vmem:[#allocation2] sm:$0xf]
  %v854 = vld [vmem:[#allocation2 + $0x4] sm:$0xf]
  %v855 = vld [vmem:[#allocation2 + $0xc] sm:$0xf]
  %v856 = vld [vmem:[#allocation2 + $0x10] sm:$0xf]
  %v857 = vld [vmem:[%s6] sm:$0xf]
  %v858 = vld [vmem:[%s6 + $0x4] sm:$0xf]
  %v859 = vld [vmem:[%s6 + $0x8] sm:$0xf]
  %v860 = vld [vmem:[%s6 + $0xc] sm:$0xf]
  %v861 = vld [vmem:[%s6 + $0x10] sm:$0xf]
  %v862 = vld [vmem:[%s6 + $0x14] sm:$0xf]
  %v863 = vld [vmem:[%s6 + $0x18] sm:$0xf]
  %v864 = vld [vmem:[%s6 + $0x1c] sm:$0xf]
  %v865 = vld [vmem:[%s6 + $0x20] sm:$0xf]
  %v866 = vld [vmem:[%s6 + $0x24] sm:$0xf]
  %v867 = vld [vmem:[%s6 + $0x28] sm:$0xf]
  %v868 = vld [vmem:[%s6 + $0x2c] sm:$0xf]
  %v869 = vld [vmem:[%s6 + $0x30] sm:$0xf]
  %v870 = vld [vmem:[%s6 + $0x34] sm:$0xf]
  %v871 = vld [vmem:[%s6 + $0x38] sm:$0xf]
  %v872 = vld [vmem:[%s6 + $0x3c] sm:$0xf]
  %v873 = vld [vmem:[#allocation2 + $0x8] sm:$0x1]
  %v874 = vld [vmem:[#allocation2 + $0x14] sm:$0x1]
  %v876 = vshrl.u32 %v853, 16
  %v878 = vrot.slane %v876, 4
  %v879 = vshll.u32 %v853, 16
  %v881 = vrot.slane %v879, 5
  %v882 = vor.u32 %v878, %v881
  %v883 = vrot.slane %v882, 4
  %v885 = vshll.u32 %v854, 16
  %v887 = vrot.slane %v885, 5
  %v888 = vsel %vm55, %v883, %v887
  %v889 = vshrl.u32 %v854, 16
  %v891 = vrot.slane %v889, 4
  %v892 = vor.u32 %v891, %v887
  %v893 = vrot.slane %v892, 4
  %v895 = vshll.u32 %v873, 16
  %v897 = vrot.slane %v895, 5
  %v898 = vsel %vm55, %v893, %v897
  %v900 = vshrl.u32 %v855, 16
  %v902 = vrot.slane %v900, 4
  %v903 = vshll.u32 %v855, 16
  %v905 = vrot.slane %v903, 5
  %v906 = vor.u32 %v902, %v905
  %v907 = vrot.slane %v906, 4
  %v909 = vshll.u32 %v856, 16
  %v911 = vrot.slane %v909, 5
  %v912 = vsel %vm55, %v907, %v911
  %v913 = vshrl.u32 %v856, 16
  %v915 = vrot.slane %v913, 4
  %v916 = vor.u32 %v915, %v911
  %v917 = vrot.slane %v916, 4
  %v919 = vshll.u32 %v874, 16
  %v921 = vrot.slane %v919, 5
  %v922 = vsel %vm55, %v917, %v921
  %s923 = scalar_lea.vmem %s6, 64
  %v924 = vld [vmem:[%s923] sm:$0xf]
  %v925 = vld [vmem:[%s923 + $0x4] sm:$0xf]
  %v926 = vld [vmem:[%s923 + $0x8] sm:$0xf]
  %v927 = vld [vmem:[%s923 + $0xc] sm:$0xf]
  %v928 = vld [vmem:[%s923 + $0x10] sm:$0xf]
  %v929 = vld [vmem:[%s923 + $0x14] sm:$0xf]
  %v930 = vld [vmem:[%s923 + $0x18] sm:$0xf]
  %v931 = vld [vmem:[%s923 + $0x1c] sm:$0xf]
  %v932 = vld [vmem:[%s923 + $0x20] sm:$0xf]
  %v933 = vld [vmem:[%s923 + $0x24] sm:$0xf]
  %v934 = vld [vmem:[%s923 + $0x28] sm:$0xf]
  %v935 = vld [vmem:[%s923 + $0x2c] sm:$0xf]
  %v936 = vld [vmem:[%s923 + $0x30] sm:$0xf]
  %v937 = vld [vmem:[%s923 + $0x34] sm:$0xf]
  %v938 = vld [vmem:[%s923 + $0x38] sm:$0xf]
  %v939 = vld [vmem:[%s923 + $0x3c] sm:$0xf]
  %v940 = vunpack.c.l.b16 %v888
  %v941 = vunpack.c.l.b16 %v898
  %v942 = vunpack.c.l.b16 %v912
  %v943 = vunpack.c.l.b16 %v922
  %v944 = vpack.c.b16 %v941, %v940
  %v945 = vpack.c.b16 %v943, %v942
  %v964 = vunpack.c.l.b16 %v924
  %v965 = vunpack.c.l.b16 %v925
  %v966 = vunpack.c.l.b16 %v926
  %v967 = vunpack.c.l.b16 %v927
  %v968 = vunpack.c.l.b16 %v928
  %v969 = vunpack.c.l.b16 %v929
  %v970 = vunpack.c.l.b16 %v930
  %v971 = vunpack.c.l.b16 %v931
  %v972 = vunpack.c.l.b16 %v932
  %v973 = vunpack.c.l.b16 %v933
  %v974 = vunpack.c.l.b16 %v934
  %v975 = vunpack.c.l.b16 %v935
  %v976 = vunpack.c.l.b16 %v936
  %v977 = vunpack.c.l.b16 %v937
  %v978 = vunpack.c.l.b16 %v938
  %v979 = vunpack.c.l.b16 %v939
  %v980 = vpack.c.b16 %v965, %v964
  %v981 = vpack.c.b16 %v967, %v966
  %v982 = vpack.c.b16 %v969, %v968
  %v983 = vpack.c.b16 %v971, %v970
  %v984 = vpack.c.b16 %v973, %v972
  %v985 = vpack.c.b16 %v975, %v974
  %v986 = vpack.c.b16 %v977, %v976
  %v987 = vpack.c.b16 %v979, %v978
  %996 = vmatprep.subr.bf16.mxu0 0
  %997 = vmatpush1.bf16.msra.mxu0 %v980
  %998 = vmatprep.subr.bf16.mxu0 0
  %999 = vmatpush1.bf16.msra.mxu0 %v981
  %1000 = vmatprep.subr.bf16.mxu0 0
  %1001 = vmatpush1.bf16.msra.mxu0 %v982
  %1002 = vmatprep.subr.bf16.mxu0 0
  %1003 = vmatpush1.bf16.msra.mxu0 %v983
  %1004 = vmatprep.subr.bf16.mxu0 0
  %1005 = vmatpush1.bf16.msra.mxu0 %v984
  %1006 = vmatprep.subr.bf16.mxu0 0
  %1007 = vmatpush1.bf16.msra.mxu0 %v985
  %1008 = vmatprep.subr.bf16.mxu0 0
  %1009 = vmatpush1.bf16.msra.mxu0 %v986
  %1010 = vmatprep.subr.bf16.mxu0 0
  %1011 = vmatpush1.bf16.msra.mxu0 %v987
  %1012 = vmatprep.subr.bf16.mxu0 0
  %1013 = vmatpush1.bf16.msra.mxu0 0
  %1014 = vmatprep.subr.bf16.mxu0 0
  %1015 = vmatpush1.bf16.msra.mxu0 0
  %1016 = vmatprep.subr.bf16.mxu0 0
  %1017 = vmatpush1.bf16.msra.mxu0 0
  %1018 = vmatprep.subr.bf16.mxu0 0
  %1019 = vmatpush1.bf16.msra.mxu0 0
  %1020 = vmatprep.subr.bf16.mxu0 0
  %1021 = vmatpush1.bf16.msra.mxu0 0
  %1022 = vmatprep.subr.bf16.mxu0 0
  %1023 = vmatpush1.bf16.msra.mxu0 0
  %1024 = vmatprep.subr.bf16.mxu0 0
  %1025 = vmatpush1.bf16.msra.mxu0 0
  %1026 = vmatprep.subr.bf16.mxu0 0
  %1027 = vmatpush1.bf16.msra.mxu0 0
  %1028 = vmatprep.mubr.bf16.mxu0 0
  %1029 = vmatmul.mubr.bf16.gmra.mrb[0].mxu0 %v944
  %v1030 = vpop.f32.mrb[0].mxu0
  %v1031 = vadd.f32 0.0, %v1030
  %v1032 = vpop.f32.mrb[0].mxu0
  %v1033 = vpop.f32.mrb[0].mxu0
  %v1034 = vadd.f32 0.0, %v1033
  %v1035 = vpop.f32.mrb[0].mxu0
  %1036 = vmatprep.mubr.bf16.mxu0 0
  %1037 = vmatmul.mubr.bf16.gmra.mrb[0].mxu0 %v945
  %v1038 = vpop.f32.mrb[0].mxu0
  %v1039 = vadd.f32 0.0, %v1038
  %v1040 = vpop.f32.mrb[0].mxu0
  %v1041 = vpop.f32.mrb[0].mxu0
  %v1042 = vadd.f32 0.0, %v1041
  %v1043 = vpop.f32.mrb[0].mxu0
  %1044 = vdwg.mxu0
  %v1049 = vunpack.c.l.b16 %v853
  %v1050 = vunpack.c.l.b16 %v854
  %v1051 = vunpack.c.l.b16 %v855
  %v1052 = vunpack.c.l.b16 %v856
  %v1053 = vpack.c.b16 %v1050, %v1049
  %v1054 = vpack.c.b16 %v1052, %v1051
  %v1073 = vunpack.c.l.b16 %v857
  %v1074 = vunpack.c.l.b16 %v858
  %v1075 = vunpack.c.l.b16 %v859
  %v1076 = vunpack.c.l.b16 %v860
  %v1077 = vunpack.c.l.b16 %v861
  %v1078 = vunpack.c.l.b16 %v862
  %v1079 = vunpack.c.l.b16 %v863
  %v1080 = vunpack.c.l.b16 %v864
  %v1081 = vunpack.c.l.b16 %v865
  %v1082 = vunpack.c.l.b16 %v866
  %v1083 = vunpack.c.l.b16 %v867
  %v1084 = vunpack.c.l.b16 %v868
  %v1085 = vunpack.c.l.b16 %v869
  %v1086 = vunpack.c.l.b16 %v870
  %v1087 = vunpack.c.l.b16 %v871
  %v1088 = vunpack.c.l.b16 %v872
  %v1089 = vpack.c.b16 %v1074, %v1073
  %v1090 = vpack.c.b16 %v1076, %v1075
  %v1091 = vpack.c.b16 %v1078, %v1077
  %v1092 = vpack.c.b16 %v1080, %v1079
  %v1093 = vpack.c.b16 %v1082, %v1081
  %v1094 = vpack.c.b16 %v1084, %v1083
  %v1095 = vpack.c.b16 %v1086, %v1085
  %v1096 = vpack.c.b16 %v1088, %v1087
  %1105 = vmatprep.subr.bf16.mxu0 0
  %1106 = vmatpush1.bf16.msra.mxu0 %v1089
  %1107 = vmatprep.subr.bf16.mxu0 0
  %1108 = vmatpush1.bf16.msra.mxu0 %v1090
  %1109 = vmatprep.subr.bf16.mxu0 0
  %1110 = vmatpush1.bf16.msra.mxu0 %v1091
  %1111 = vmatprep.subr.bf16.mxu0 0
  %1112 = vmatpush1.bf16.msra.mxu0 %v1092
  %1113 = vmatprep.subr.bf16.mxu0 0
  %1114 = vmatpush1.bf16.msra.mxu0 %v1093
  %1115 = vmatprep.subr.bf16.mxu0 0
  %1116 = vmatpush1.bf16.msra.mxu0 %v1094
  %1117 = vmatprep.subr.bf16.mxu0 0
  %1118 = vmatpush1.bf16.msra.mxu0 %v1095
  %1119 = vmatprep.subr.bf16.mxu0 0
  %1120 = vmatpush1.bf16.msra.mxu0 %v1096
  %1121 = vmatprep.subr.bf16.mxu0 0
  %1122 = vmatpush1.bf16.msra.mxu0 0
  %1123 = vmatprep.subr.bf16.mxu0 0
  %1124 = vmatpush1.bf16.msra.mxu0 0
  %1125 = vmatprep.subr.bf16.mxu0 0
  %1126 = vmatpush1.bf16.msra.mxu0 0
  %1127 = vmatprep.subr.bf16.mxu0 0
  %1128 = vmatpush1.bf16.msra.mxu0 0
  %1129 = vmatprep.subr.bf16.mxu0 0
  %1130 = vmatpush1.bf16.msra.mxu0 0
  %1131 = vmatprep.subr.bf16.mxu0 0
  %1132 = vmatpush1.bf16.msra.mxu0 0
  %1133 = vmatprep.subr.bf16.mxu0 0
  %1134 = vmatpush1.bf16.msra.mxu0 0
  %1135 = vmatprep.subr.bf16.mxu0 0
  %1136 = vmatpush1.bf16.msra.mxu0 0
  %1137 = vmatprep.mubr.bf16.mxu0 0
  %1138 = vmatmul.mubr.bf16.gmra.mrb[0].mxu0 %v1053
  %v1139 = vpop.f32.mrb[0].mxu0
  %v1140 = vadd.f32 %v1031, %v1139
  %v1141 = vpop.f32.mrb[0].mxu0
  %v1142 = vpop.f32.mrb[0].mxu0
  %v1143 = vadd.f32 %v1034, %v1142
  %v1144 = vpop.f32.mrb[0].mxu0
  %1145 = vmatprep.mubr.bf16.mxu0 0
  %1146 = vmatmul.mubr.bf16.gmra.mrb[0].mxu0 %v1054
  %v1147 = vpop.f32.mrb[0].mxu0
  %v1148 = vadd.f32 %v1039, %v1147
  %v1149 = vpop.f32.mrb[0].mxu0
  %v1150 = vpop.f32.mrb[0].mxu0
  %v1151 = vadd.f32 %v1042, %v1150
  %v1152 = vpop.f32.mrb[0].mxu0
  %1153 = vdwg.mxu0
  %v1154 = vld [vmem:[#allocation2] sm:$0xe]
  %v1155 = vld [vmem:[#allocation2 + $0xc] sm:$0xe]
  %v1160 = vrot.slane %v1154, 5
  %v1161 = vrot.slane %v1160, 4
  %v1162 = vrot.slane %v854, 5
  %v1163 = vsel %vm296, %v1161, %v1162
  %v1164 = vrot.slane %v1162, 4
  %v1165 = vrot.slane %v873, 5
  %v1166 = vsel %vm296, %v1164, %v1165
  %v1167 = vrot.slane %v1155, 5
  %v1168 = vrot.slane %v1167, 4
  %v1169 = vrot.slane %v856, 5
  %v1170 = vsel %vm296, %v1168, %v1169
  %v1171 = vrot.slane %v1169, 4
  %v1172 = vrot.slane %v874, 5
  %v1173 = vsel %vm296, %v1171, %v1172
  %s1174 = scalar_lea.vmem %s6, 128
  %v1175 = vld [vmem:[%s1174] sm:$0xf]
  %v1176 = vld [vmem:[%s1174 + $0x4] sm:$0xf]
  %v1177 = vld [vmem:[%s1174 + $0x8] sm:$0xf]
  %v1178 = vld [vmem:[%s1174 + $0xc] sm:$0xf]
  %v1179 = vld [vmem:[%s1174 + $0x10] sm:$0xf]
  %v1180 = vld [vmem:[%s1174 + $0x14] sm:$0xf]
  %v1181 = vld [vmem:[%s1174 + $0x18] sm:$0xf]
  %v1182 = vld [vmem:[%s1174 + $0x1c] sm:$0xf]
  %v1183 = vld [vmem:[%s1174 + $0x20] sm:$0xf]
  %v1184 = vld [vmem:[%s1174 + $0x24] sm:$0xf]
  %v1185 = vld [vmem:[%s1174 + $0x28] sm:$0xf]
  %v1186 = vld [vmem:[%s1174 + $0x2c] sm:$0xf]
  %v1187 = vld [vmem:[%s1174 + $0x30] sm:$0xf]
  %v1188 = vld [vmem:[%s1174 + $0x34] sm:$0xf]
  %v1189 = vld [vmem:[%s1174 + $0x38] sm:$0xf]
  %v1190 = vld [vmem:[%s1174 + $0x3c] sm:$0xf]
  %v1191 = vunpack.c.l.b16 %v1163
  %v1192 = vunpack.c.l.b16 %v1166
  %v1193 = vunpack.c.l.b16 %v1170
  %v1194 = vunpack.c.l.b16 %v1173
  %v1195 = vpack.c.b16 %v1192, %v1191
  %v1196 = vpack.c.b16 %v1194, %v1193
  %v1215 = vunpack.c.l.b16 %v1175
  %v1216 = vunpack.c.l.b16 %v1176
  %v1217 = vunpack.c.l.b16 %v1177
  %v1218 = vunpack.c.l.b16 %v1178
  %v1219 = vunpack.c.l.b16 %v1179
  %v1220 = vunpack.c.l.b16 %v1180
  %v1221 = vunpack.c.l.b16 %v1181
  %v1222 = vunpack.c.l.b16 %v1182
  %v1223 = vunpack.c.l.b16 %v1183
  %v1224 = vunpack.c.l.b16 %v1184
  %v1225 = vunpack.c.l.b16 %v1185
  %v1226 = vunpack.c.l.b16 %v1186
  %v1227 = vunpack.c.l.b16 %v1187
  %v1228 = vunpack.c.l.b16 %v1188
  %v1229 = vunpack.c.l.b16 %v1189
  %v1230 = vunpack.c.l.b16 %v1190
  %v1231 = vpack.c.b16 %v1216, %v1215
  %v1232 = vpack.c.b16 %v1218, %v1217
  %v1233 = vpack.c.b16 %v1220, %v1219
  %v1234 = vpack.c.b16 %v1222, %v1221
  %v1235 = vpack.c.b16 %v1224, %v1223
  %v1236 = vpack.c.b16 %v1226, %v1225
  %v1237 = vpack.c.b16 %v1228, %v1227
  %v1238 = vpack.c.b16 %v1230, %v1229
  %1247 = vmatprep.subr.bf16.mxu0 0
  %1248 = vmatpush1.bf16.msra.mxu0 %v1231
  %1249 = vmatprep.subr.bf16.mxu0 0
  %1250 = vmatpush1.bf16.msra.mxu0 %v1232
  %1251 = vmatprep.subr.bf16.mxu0 0
  %1252 = vmatpush1.bf16.msra.mxu0 %v1233
  %1253 = vmatprep.subr.bf16.mxu0 0
  %1254 = vmatpush1.bf16.msra.mxu0 %v1234
  %1255 = vmatprep.subr.bf16.mxu0 0
  %1256 = vmatpush1.bf16.msra.mxu0 %v1235
  %1257 = vmatprep.subr.bf16.mxu0 0
  %1258 = vmatpush1.bf16.msra.mxu0 %v1236
  %1259 = vmatprep.subr.bf16.mxu0 0
  %1260 = vmatpush1.bf16.msra.mxu0 %v1237
  %1261 = vmatprep.subr.bf16.mxu0 0
  %1262 = vmatpush1.bf16.msra.mxu0 %v1238
  %1263 = vmatprep.subr.bf16.mxu0 0
  %1264 = vmatpush1.bf16.msra.mxu0 0
  %1265 = vmatprep.subr.bf16.mxu0 0
  %1266 = vmatpush1.bf16.msra.mxu0 0
  %1267 = vmatprep.subr.bf16.mxu0 0
  %1268 = vmatpush1.bf16.msra.mxu0 0
  %1269 = vmatprep.subr.bf16.mxu0 0
  %1270 = vmatpush1.bf16.msra.mxu0 0
  %1271 = vmatprep.subr.bf16.mxu0 0
  %1272 = vmatpush1.bf16.msra.mxu0 0
  %1273 = vmatprep.subr.bf16.mxu0 0
  %1274 = vmatpush1.bf16.msra.mxu0 0
  %1275 = vmatprep.subr.bf16.mxu0 0
  %1276 = vmatpush1.bf16.msra.mxu0 0
  %1277 = vmatprep.subr.bf16.mxu0 0
  %1278 = vmatpush1.bf16.msra.mxu0 0
  %1279 = vmatprep.mubr.bf16.mxu0 0
  %1280 = vmatmul.mubr.bf16.gmra.mrb[0].mxu0 %v1195
  %v1281 = vpop.f32.mrb[0].mxu0
  %v1282 = vadd.f32 0.0, %v1281
  %v1283 = vpop.f32.mrb[0].mxu0
  %v1284 = vpop.f32.mrb[0].mxu0
  %v1285 = vadd.f32 0.0, %v1284
  %v1286 = vpop.f32.mrb[0].mxu0
  %1287 = vmatprep.mubr.bf16.mxu0 0
  %1288 = vmatmul.mubr.bf16.gmra.mrb[0].mxu0 %v1196
  %v1289 = vpop.f32.mrb[0].mxu0
  %v1290 = vadd.f32 0.0, %v1289
  %v1291 = vpop.f32.mrb[0].mxu0
  %v1292 = vpop.f32.mrb[0].mxu0
  %v1293 = vadd.f32 0.0, %v1292
  %v1294 = vpop.f32.mrb[0].mxu0
  %1295 = vdwg.mxu0
  %v1296 = vadd.f32 %v1140, %v1282
  %v1297 = vadd.f32 %v1143, %v1285
  %v1298 = vadd.f32 %v1148, %v1290
  %v1299 = vadd.f32 %v1151, %v1293
  %v1300 = vld [vmem:[%s7] sm:$0xff]
  %v1301 = vld [vmem:[%s8] sm:$0xff]
  %v1302 = vld [vmem:[%s8 + $0x8] sm:$0xff]
  %v1303 = vld [vmem:[%s8 + $0x10] sm:$0xff]
  %v1304 = vld [vmem:[%s8 + $0x18] sm:$0xff]
  %v1305 = vld [vmem:[%s8 + $0x20] sm:$0xff]
  %v1306 = vld [vmem:[%s8 + $0x28] sm:$0xff]
  %v1307 = vld [vmem:[%s8 + $0x30] sm:$0xff]
  %v1308 = vld [vmem:[%s8 + $0x38] sm:$0xff]
  %v1309 = vld [vmem:[%s8 + $0x40] sm:$0xff]
  %v1310 = vld [vmem:[%s8 + $0x48] sm:$0xff]
  %v1311 = vld [vmem:[%s8 + $0x50] sm:$0xff]
  %v1312 = vld [vmem:[%s8 + $0x58] sm:$0xff]
  %v1313 = vld [vmem:[%s8 + $0x60] sm:$0xff]
  %v1314 = vld [vmem:[%s8 + $0x68] sm:$0xff]
  %v1315 = vld [vmem:[%s8 + $0x70] sm:$0xff]
  %v1316 = vld [vmem:[%s8 + $0x78] sm:$0xff]
  %v1317 = vld [vmem:[%s9] sm:$0x1]
  %v1318 = vld [vmem:[%s10] sm:$0x1]
  %v1319 = vadd.f32 %v1296, %v1297
  %v1320 = vadd.f32 %v1319, %v1298
  %v1321 = vadd.f32 %v1320, %v1299
  %v1322 = vrot.slane %v1321, 4
  %v1323 = vadd.f32 %v1321, %v1322
  %v1324 = vrot.slane %v1323, 2
  %v1325 = vadd.f32 %v1323, %v1324
  %v1326 = vrot.slane %v1325, 1
  %v1327 = vadd.f32 %v1325, %v1326
  %v1328 = vmul.f32 %v1296, %v1296
  %v1329 = vmul.f32 %v1297, %v1297
  %v1330 = vmul.f32 %v1298, %v1298
  %v1331 = vmul.f32 %v1299, %v1299
  %v1332 = vadd.f32 %v1328, %v1329
  %v1333 = vadd.f32 %v1332, %v1330
  %v1334 = vadd.f32 %v1333, %v1331
  %v1335 = vrot.slane %v1334, 4
  %v1336 = vadd.f32 %v1334, %v1335
  %v1337 = vrot.slane %v1336, 2
  %v1338 = vadd.f32 %v1336, %v1337
  %v1339 = vrot.slane %v1338, 1
  %v1340 = vadd.f32 %v1338, %v1339
  %1341 = vmatprep.subr.mxu0 0.0
  %1342 = vmatpush1.msra.mxu0 %v1301
  %1343 = vmatprep.subr.mxu0 0.0
  %1344 = vmatpush1.msra.mxu0 %v1302
  %1345 = vmatprep.subr.mxu0 0.0
  %1346 = vmatpush1.msra.mxu0 %v1303
  %1347 = vmatprep.subr.mxu0 0.0
  %1348 = vmatpush1.msra.mxu0 %v1304
  %1349 = vmatprep.subr.mxu0 0.0
  %1350 = vmatpush1.msra.mxu0 %v1305
  %1351 = vmatprep.subr.mxu0 0.0
  %1352 = vmatpush1.msra.mxu0 %v1306
  %1353 = vmatprep.subr.mxu0 0.0
  %1354 = vmatpush1.msra.mxu0 %v1307
  %1355 = vmatprep.subr.mxu0 0.0
  %1356 = vmatpush1.msra.mxu0 %v1308
  %1357 = vmatprep.subr.mxu0 0.0
  %1358 = vmatpush1.msra.mxu0 %v1309
  %1359 = vmatprep.subr.mxu0 0.0
  %1360 = vmatpush1.msra.mxu0 %v1310
  %1361 = vmatprep.subr.mxu0 0.0
  %1362 = vmatpush1.msra.mxu0 %v1311
  %1363 = vmatprep.subr.mxu0 0.0
  %1364 = vmatpush1.msra.mxu0 %v1312
  %1365 = vmatprep.subr.mxu0 0.0
  %1366 = vmatpush1.msra.mxu0 %v1313
  %1367 = vmatprep.subr.mxu0 0.0
  %1368 = vmatpush1.msra.mxu0 %v1314
  %1369 = vmatprep.subr.mxu0 0.0
  %1370 = vmatpush1.msra.mxu0 %v1315
  %1371 = vmatprep.subr.mxu0 0.0
  %1372 = vmatpush1.msra.mxu0 %v1316
  %1373 = vmatprep.subr.mxu0 0.0
  %1374 = vmatpush1.msra.mxu0 0.0
  %1375 = vmatprep.subr.mxu0 0.0
  %1376 = vmatpush1.msra.mxu0 0.0
  %1377 = vmatprep.subr.mxu0 0.0
  %1378 = vmatpush1.msra.mxu0 0.0
  %1379 = vmatprep.subr.mxu0 0.0
  %1380 = vmatpush1.msra.mxu0 0.0
  %1381 = vmatprep.subr.mxu0 0.0
  %1382 = vmatpush1.msra.mxu0 0.0
  %1383 = vmatprep.subr.mxu0 0.0
  %1384 = vmatpush1.msra.mxu0 0.0
  %1385 = vmatprep.subr.mxu0 0.0
  %1386 = vmatpush1.msra.mxu0 0.0
  %1387 = vmatprep.subr.mxu0 0.0
  %1388 = vmatpush1.msra.mxu0 0.0
  %1389 = vmatprep.subr.mxu0 0.0
  %1390 = vmatpush1.msra.mxu0 0.0
  %1391 = vmatprep.subr.mxu0 0.0
  %1392 = vmatpush1.msra.mxu0 0.0
  %1393 = vmatprep.subr.mxu0 0.0
  %1394 = vmatpush1.msra.mxu0 0.0
  %1395 = vmatprep.subr.mxu0 0.0
  %1396 = vmatpush1.msra.mxu0 0.0
  %1397 = vmatprep.subr.mxu0 0.0
  %1398 = vmatpush1.msra.mxu0 0.0
  %1399 = vmatprep.subr.mxu0 0.0
  %1400 = vmatpush1.msra.mxu0 0.0
  %1401 = vmatprep.subr.mxu0 0.0
  %1402 = vmatpush1.msra.mxu0 0.0
  %1403 = vmatprep.subr.mxu0 0.0
  %1404 = vmatpush1.msra.mxu0 0.0
  %1405 = vmatprep.mubr.f32.mxu0 0.0
  %1406 = vmatmul.mubr.f32.gmra.mrb[0].mxu0 %v1327
  %v1407 = vpop.f32.mrb[0].mxu0
  %v1408 = vadd.f32 0.0, %v1407
  %v1409 = vpop.f32.mrb[0].mxu0
  %1410 = vdwg.mxu0
  %1411 = vmatprep.subr.mxu0 0.0
  %1412 = vmatpush1.msra.mxu0 %v1301
  %1413 = vmatprep.subr.mxu0 0.0
  %1414 = vmatpush1.msra.mxu0 %v1302
  %1415 = vmatprep.subr.mxu0 0.0
  %1416 = vmatpush1.msra.mxu0 %v1303
  %1417 = vmatprep.subr.mxu0 0.0
  %1418 = vmatpush1.msra.mxu0 %v1304
  %1419 = vmatprep.subr.mxu0 0.0
  %1420 = vmatpush1.msra.mxu0 %v1305
  %1421 = vmatprep.subr.mxu0 0.0
  %1422 = vmatpush1.msra.mxu0 %v1306
  %1423 = vmatprep.subr.mxu0 0.0
  %1424 = vmatpush1.msra.mxu0 %v1307
  %1425 = vmatprep.subr.mxu0 0.0
  %1426 = vmatpush1.msra.mxu0 %v1308
  %1427 = vmatprep.subr.mxu0 0.0
  %1428 = vmatpush1.msra.mxu0 %v1309
  %1429 = vmatprep.subr.mxu0 0.0
  %1430 = vmatpush1.msra.mxu0 %v1310
  %1431 = vmatprep.subr.mxu0 0.0
  %1432 = vmatpush1.msra.mxu0 %v1311
  %1433 = vmatprep.subr.mxu0 0.0
  %1434 = vmatpush1.msra.mxu0 %v1312
  %1435 = vmatprep.subr.mxu0 0.0
  %1436 = vmatpush1.msra.mxu0 %v1313
  %1437 = vmatprep.subr.mxu0 0.0
  %1438 = vmatpush1.msra.mxu0 %v1314
  %1439 = vmatprep.subr.mxu0 0.0
  %1440 = vmatpush1.msra.mxu0 %v1315
  %1441 = vmatprep.subr.mxu0 0.0
  %1442 = vmatpush1.msra.mxu0 %v1316
  %1443 = vmatprep.subr.mxu0 0.0
  %1444 = vmatpush1.msra.mxu0 0.0
  %1445 = vmatprep.subr.mxu0 0.0
  %1446 = vmatpush1.msra.mxu0 0.0
  %1447 = vmatprep.subr.mxu0 0.0
  %1448 = vmatpush1.msra.mxu0 0.0
  %1449 = vmatprep.subr.mxu0 0.0
  %1450 = vmatpush1.msra.mxu0 0.0
  %1451 = vmatprep.subr.mxu0 0.0
  %1452 = vmatpush1.msra.mxu0 0.0
  %1453 = vmatprep.subr.mxu0 0.0
  %1454 = vmatpush1.msra.mxu0 0.0
  %1455 = vmatprep.subr.mxu0 0.0
  %1456 = vmatpush1.msra.mxu0 0.0
  %1457 = vmatprep.subr.mxu0 0.0
  %1458 = vmatpush1.msra.mxu0 0.0
  %1459 = vmatprep.subr.mxu0 0.0
  %1460 = vmatpush1.msra.mxu0 0.0
  %1461 = vmatprep.subr.mxu0 0.0
  %1462 = vmatpush1.msra.mxu0 0.0
  %1463 = vmatprep.subr.mxu0 0.0
  %1464 = vmatpush1.msra.mxu0 0.0
  %1465 = vmatprep.subr.mxu0 0.0
  %1466 = vmatpush1.msra.mxu0 0.0
  %1467 = vmatprep.subr.mxu0 0.0
  %1468 = vmatpush1.msra.mxu0 0.0
  %1469 = vmatprep.subr.mxu0 0.0
  %1470 = vmatpush1.msra.mxu0 0.0
  %1471 = vmatprep.subr.mxu0 0.0
  %1472 = vmatpush1.msra.mxu0 0.0
  %1473 = vmatprep.subr.mxu0 0.0
  %1474 = vmatpush1.msra.mxu0 0.0
  %1475 = vmatprep.mubr.f32.mxu0 0.0
  %1476 = vmatmul.mubr.f32.gmra.mrb[0].mxu0 %v1340
  %v1477 = vpop.f32.mrb[0].mxu0
  %v1478 = vadd.f32 0.0, %v1477
  %v1479 = vpop.f32.mrb[0].mxu0
  %1480 = vdwg.mxu0
  %v1481 = vmul.f32 %v1408, 0.001953125
  %v1482 = vmul.f32 %v1478, 0.001953125
  %v1483 = vmul.f32 %v1481, %v1481
  %v1484 = vsub.f32 %v1482, %v1483
  %v1485 = vadd.f32 %v1484, 1e-05
  %v1486 = vrsqrt.pop %v1485
  %v1487 = vmul.f32 %v1317, %v1486
  %v1488 = vmul.f32 %v1481, %v1487
  %v1489 = vsub.f32 %v1318, %v1488
  %v1491 = vsel %vm599, %v1487, 0
  %1493 = vmatprep.subr.mxu0 0.0
  %1494 = vmatpush1.msra.mxu0 %v1300
  %1495 = vmatprep.subr.mxu0 0.0
  %1496 = vmatpush1.msra.mxu0 0.0
  %1497 = vmatprep.subr.mxu0 0.0
  %1498 = vmatpush1.msra.mxu0 0.0
  %1499 = vmatprep.subr.mxu0 0.0
  %1500 = vmatpush1.msra.mxu0 0.0
  %1501 = vmatprep.subr.mxu0 0.0
  %1502 = vmatpush1.msra.mxu0 0.0
  %1503 = vmatprep.subr.mxu0 0.0
  %1504 = vmatpush1.msra.mxu0 0.0
  %1505 = vmatprep.subr.mxu0 0.0
  %1506 = vmatpush1.msra.mxu0 0.0
  %1507 = vmatprep.subr.mxu0 0.0
  %1508 = vmatpush1.msra.mxu0 0.0
  %1509 = vmatprep.subr.mxu0 0.0
  %1510 = vmatpush1.msra.mxu0 0.0
  %1511 = vmatprep.subr.mxu0 0.0
  %1512 = vmatpush1.msra.mxu0 0.0
  %1513 = vmatprep.subr.mxu0 0.0
  %1514 = vmatpush1.msra.mxu0 0.0
  %1515 = vmatprep.subr.mxu0 0.0
  %1516 = vmatpush1.msra.mxu0 0.0
  %1517 = vmatprep.subr.mxu0 0.0
  %1518 = vmatpush1.msra.mxu0 0.0
  %1519 = vmatprep.subr.mxu0 0.0
  %1520 = vmatpush1.msra.mxu0 0.0
  %1521 = vmatprep.subr.mxu0 0.0
  %1522 = vmatpush1.msra.mxu0 0.0
  %1523 = vmatprep.subr.mxu0 0.0
  %1524 = vmatpush1.msra.mxu0 0.0
  %1525 = vmatprep.subr.mxu0 0.0
  %1526 = vmatpush1.msra.mxu0 0.0
  %1527 = vmatprep.subr.mxu0 0.0
  %1528 = vmatpush1.msra.mxu0 0.0
  %1529 = vmatprep.subr.mxu0 0.0
  %1530 = vmatpush1.msra.mxu0 0.0
  %1531 = vmatprep.subr.mxu0 0.0
  %1532 = vmatpush1.msra.mxu0 0.0
  %1533 = vmatprep.subr.mxu0 0.0
  %1534 = vmatpush1.msra.mxu0 0.0
  %1535 = vmatprep.subr.mxu0 0.0
  %1536 = vmatpush1.msra.mxu0 0.0
  %1537 = vmatprep.subr.mxu0 0.0
  %1538 = vmatpush1.msra.mxu0 0.0
  %1539 = vmatprep.subr.mxu0 0.0
  %1540 = vmatpush1.msra.mxu0 0.0
  %1541 = vmatprep.subr.mxu0 0.0
  %1542 = vmatpush1.msra.mxu0 0.0
  %1543 = vmatprep.subr.mxu0 0.0
  %1544 = vmatpush1.msra.mxu0 0.0
  %1545 = vmatprep.subr.mxu0 0.0
  %1546 = vmatpush1.msra.mxu0 0.0
  %1547 = vmatprep.subr.mxu0 0.0
  %1548 = vmatpush1.msra.mxu0 0.0
  %1549 = vmatprep.subr.mxu0 0.0
  %1550 = vmatpush1.msra.mxu0 0.0
  %1551 = vmatprep.subr.mxu0 0.0
  %1552 = vmatpush1.msra.mxu0 0.0
  %1553 = vmatprep.subr.mxu0 0.0
  %1554 = vmatpush1.msra.mxu0 0.0
  %1555 = vmatprep.subr.mxu0 0.0
  %1556 = vmatpush1.msra.mxu0 0.0
  %1557 = vmatprep.mubr.f32.mxu0 0.0
  %1558 = vmatmul.mubr.f32.gmra.mrb[0].mxu0 %v1491
  %v1559 = vpop.f32.mrb[0].mxu0
  %v1560 = vadd.f32 0.0, %v1559
  %v1561 = vpop.f32.mrb[0].mxu0
  %1562 = vdwg.mxu0
  %v1564 = vsel %vm599, %v1489, 0
  %1566 = vmatprep.subr.mxu0 0.0
  %1567 = vmatpush1.msra.mxu0 %v1300
  %1568 = vmatprep.subr.mxu0 0.0
  %1569 = vmatpush1.msra.mxu0 0.0
  %1570 = vmatprep.subr.mxu0 0.0
  %1571 = vmatpush1.msra.mxu0 0.0
  %1572 = vmatprep.subr.mxu0 0.0
  %1573 = vmatpush1.msra.mxu0 0.0
  %1574 = vmatprep.subr.mxu0 0.0
  %1575 = vmatpush1.msra.mxu0 0.0
  %1576 = vmatprep.subr.mxu0 0.0
  %1577 = vmatpush1.msra.mxu0 0.0
  %1578 = vmatprep.subr.mxu0 0.0
  %1579 = vmatpush1.msra.mxu0 0.0
  %1580 = vmatprep.subr.mxu0 0.0
  %1581 = vmatpush1.msra.mxu0 0.0
  %1582 = vmatprep.subr.mxu0 0.0
  %1583 = vmatpush1.msra.mxu0 0.0
  %1584 = vmatprep.subr.mxu0 0.0
  %1585 = vmatpush1.msra.mxu0 0.0
  %1586 = vmatprep.subr.mxu0 0.0
  %1587 = vmatpush1.msra.mxu0 0.0
  %1588 = vmatprep.subr.mxu0 0.0
  %1589 = vmatpush1.msra.mxu0 0.0
  %1590 = vmatprep.subr.mxu0 0.0
  %1591 = vmatpush1.msra.mxu0 0.0
  %1592 = vmatprep.subr.mxu0 0.0
  %1593 = vmatpush1.msra.mxu0 0.0
  %1594 = vmatprep.subr.mxu0 0.0
  %1595 = vmatpush1.msra.mxu0 0.0
  %1596 = vmatprep.subr.mxu0 0.0
  %1597 = vmatpush1.msra.mxu0 0.0
  %1598 = vmatprep.subr.mxu0 0.0
  %1599 = vmatpush1.msra.mxu0 0.0
  %1600 = vmatprep.subr.mxu0 0.0
  %1601 = vmatpush1.msra.mxu0 0.0
  %1602 = vmatprep.subr.mxu0 0.0
  %1603 = vmatpush1.msra.mxu0 0.0
  %1604 = vmatprep.subr.mxu0 0.0
  %1605 = vmatpush1.msra.mxu0 0.0
  %1606 = vmatprep.subr.mxu0 0.0
  %1607 = vmatpush1.msra.mxu0 0.0
  %1608 = vmatprep.subr.mxu0 0.0
  %1609 = vmatpush1.msra.mxu0 0.0
  %1610 = vmatprep.subr.mxu0 0.0
  %1611 = vmatpush1.msra.mxu0 0.0
  %1612 = vmatprep.subr.mxu0 0.0
  %1613 = vmatpush1.msra.mxu0 0.0
  %1614 = vmatprep.subr.mxu0 0.0
  %1615 = vmatpush1.msra.mxu0 0.0
  %1616 = vmatprep.subr.mxu0 0.0
  %1617 = vmatpush1.msra.mxu0 0.0
  %1618 = vmatprep.subr.mxu0 0.0
  %1619 = vmatpush1.msra.mxu0 0.0
  %1620 = vmatprep.subr.mxu0 0.0
  %1621 = vmatpush1.msra.mxu0 0.0
  %1622 = vmatprep.subr.mxu0 0.0
  %1623 = vmatpush1.msra.mxu0 0.0
  %1624 = vmatprep.subr.mxu0 0.0
  %1625 = vmatpush1.msra.mxu0 0.0
  %1626 = vmatprep.subr.mxu0 0.0
  %1627 = vmatpush1.msra.mxu0 0.0
  %1628 = vmatprep.subr.mxu0 0.0
  %1629 = vmatpush1.msra.mxu0 0.0
  %1630 = vmatprep.mubr.f32.mxu0 0.0
  %1631 = vmatmul.mubr.f32.gmra.mrb[0].mxu0 %v1564
  %v1632 = vpop.f32.mrb[0].mxu0
  %v1633 = vadd.f32 0.0, %v1632
  %v1634 = vpop.f32.mrb[0].mxu0
  %1635 = vdwg.mxu0
  %v1636 = vlaneseq
  %v1637 = vshrl.u32 %v1636, 7
  %v1638 = vsub.s32 0, %v1637
  %v1639 = vrot.slane %v1560, %v1638
  %v1640 = vmul.f32 %v1296, %v1639
  %v1641 = vmul.f32 %v1297, %v1639
  %v1642 = vmul.f32 %v1298, %v1639
  %v1643 = vmul.f32 %v1299, %v1639
  %v1644 = vlaneseq
  %v1645 = vshrl.u32 %v1644, 7
  %v1646 = vsub.s32 0, %v1645
  %v1647 = vrot.slane %v1633, %v1646
  %v1648 = vadd.f32 %v1640, %v1647
  %v1649 = vadd.f32 %v1641, %v1647
  %v1650 = vadd.f32 %v1642, %v1647
  %v1651 = vadd.f32 %v1643, %v1647
  %v1652 = vmax.f32 %v1648, 0.0
  %v1653 = vmax.f32 %v1649, 0.0
  %v1654 = vmax.f32 %v1650, 0.0
  %v1655 = vmax.f32 %v1651, 0.0
  %1656 = vst [vmem:[%s11] sm:$0xff] %v1652
  %1657 = vst [vmem:[%s11 + $0x8] sm:$0xff] %v1653
  %1658 = vst [vmem:[%s11 + $0x10] sm:$0xff] %v1654
  %1659 = vst [vmem:[%s11 + $0x18] sm:$0xff] %v1655
  // Predicated region
  $region46: #{conv_block_forward.1} parent=0 // pred_check
    _
  $region47: #{conv_block_forward.1} parent=0 // pred_check_branch
    %1661 = sbr.rel (0) target = $region49
  $region48: #{conv_block_forward.1} parent=0 // pred_region
    _
  $region49: #{conv_block_forward.1} parent=0 // pred_fallthru
    _
  // Predicated region
  $region50: #{conv_block_forward.1} parent=0 // pred_check
    _
  $region51: #{conv_block_forward.1} parent=0 // pred_check_branch
    %1663 = sbr.rel (0) target = $region53
  $region52: #{conv_block_forward.1} parent=0 // pred_region
    _
  $region53: #{conv_block_forward.1} parent=0 // pred_fallthru
    _

</llo_original>
